<compile_context>
chip_gen: v7x
topology: tpu7x:2x2x1
jax: 0.10.0
libtpu: 0.0.40
codegen_flags: <defaults>
</compile_context>

<pallas_src>
import math

import jax
import jax.numpy as jnp
from jax.experimental import pallas as pl
from jax.experimental.pallas import tpu as pltpu


# ----------------------------------------------------------------------------
# in-kernel math helpers
# ----------------------------------------------------------------------------
def _gelu_exact(v):
    # PyTorch nn.GELU default (exact, erf-based).
    return 0.5 * v * (1.0 + jax.lax.erf(v * (1.0 / math.sqrt(2.0))))


def _layernorm_cm(v, w_col, b_col, eps=1e-5):
    """LayerNorm over the channel (sublane) axis of a channel-major (C, N) tile."""
    mu = jnp.mean(v, axis=0, keepdims=True)
    var = jnp.mean((v - mu) ** 2, axis=0, keepdims=True)
    return (v - mu) * jax.lax.rsqrt(var + eps) * w_col + b_col


def _ln_lastdim(z, g, b, eps=1e-5):
    mu = jnp.mean(z, axis=-1, keepdims=True)
    var = jnp.mean((z - mu) ** 2, axis=-1, keepdims=True)
    return (z - mu) * jax.lax.rsqrt(var + eps) * g + b


# ----------------------------------------------------------------------------
# Fused stage kernel (channel-major, permuted tokens, single grid step)
# ----------------------------------------------------------------------------
def make_stage_kernel(num_blocks, C, Nm):
    moff = 8 * num_blocks   # column offset of merge-LN vectors inside the slab

    def stage_kernel(x_ref, pos_ref, wblk_ref, vec_ref, mw_ref, o_ref):
        # x_ref   : (C, N)         channel-major tokens, N = 4*Nm, columns in
        #                          PatchMerging-group-major order (k*Nm + m)
        # pos_ref : (C, N)         positional embedding, batch-broadcast + permuted
        # wblk_ref: (nb*4, C, C)   per-block fc weights, PyTorch (out, in) layout
        # vec_ref : (C, nb*8 + 8)  per-block [ln1w,ln1b,b1,b2,ln2w,ln2b,b3,b4]
        #                          columns, then merge-LN gamma/beta per-part chunks
        # mw_ref  : (Dout, 4C)     merge reduction weight (no bias)
        # o_ref   : (Dout, Nm)     channel-major merged output
        f32 = jnp.float32
        vec = vec_ref[...].astype(f32)

        def col(i):                     # (C, 1) channel column, static lane slice
            return vec[:, i:i + 1]

        x = x_ref[...].astype(f32) + pos_ref[...].astype(f32)

        for blk in range(num_blocks):
            wo, vo = 4 * blk, 8 * blk
            # path 1: LN -> fc1 -> GELU -> fc2, residual
            h = _layernorm_cm(x, col(vo + 0), col(vo + 1))
            h = jnp.dot(wblk_ref[wo + 0], h, preferred_element_type=f32) + col(vo + 2)
            h = _gelu_exact(h)
            x = x + jnp.dot(wblk_ref[wo + 1], h, preferred_element_type=f32) + col(vo + 3)
            # path 2: LN -> fc3 -> GELU -> fc4, residual
            h2 = _layernorm_cm(x, col(vo + 4), col(vo + 5))
            h2 = jnp.dot(wblk_ref[wo + 2], h2, preferred_element_type=f32) + col(vo + 6)
            h2 = _gelu_exact(h2)
            x = x + jnp.dot(wblk_ref[wo + 3], h2, preferred_element_type=f32) + col(vo + 7)

        # PatchMerging on the permuted layout: the four 2x2-patch groups are
        # static lane slices of width Nm (no selection-matrix gather).
        parts = [x[:, k * Nm:(k + 1) * Nm] for k in range(4)]        # each (C, Nm)
        inv_4c = 1.0 / (4.0 * C)
        mu = sum(jnp.sum(p, axis=0, keepdims=True) for p in parts) * inv_4c      # (1, Nm)
        var = sum(jnp.sum((p - mu) ** 2, axis=0, keepdims=True) for p in parts) * inv_4c
        inv_std = jax.lax.rsqrt(var + 1e-5)
        # per-channel affine applied per part, then one sublane concat and a
        # single lane-dense (Dout, 4C) x (4C, Nm) reduction matmul.
        xm = jnp.concatenate(
            [(parts[k] - mu) * inv_std * col(moff + k) + col(moff + 4 + k)
             for k in range(4)], axis=0)                              # (4C, Nm)
        o_ref[...] = jnp.dot(mw_ref[...], xm,
                             preferred_element_type=f32).astype(o_ref.dtype)

    return stage_kernel


# ----------------------------------------------------------------------------
# Wrapper: token permutation + pallas_call
# ----------------------------------------------------------------------------
def _to_merge_major_cm(a):
    """(B, H, W, C) -> channel-major (C, N) with PatchMerging-group-major token
    order: column = k*Nm + m with k in Swin order x0,x1,x2,x3 (k = dw*2 + dh)
    and m = b*Hm*Wm + i*Wm + j."""
    B, H, W, C = a.shape
    Hm, Wm = H // 2, W // 2
    a = a.reshape(B, Hm, 2, Wm, 2, C)          # (B, i, dh, j, dw, C)
    a = a.transpose(4, 2, 0, 1, 3, 5)          # (dw, dh, B, i, j, C)
    return a.reshape(4 * B * Hm * Wm, C).T     # (C, N)


def basic_stage_forward(x, params):
    """x: (B, H, W, C) channels-last -> (B, H/2, W/2, out_dim)."""
    B, H, W, C = x.shape
    pos = params["pos_emb"]                                   # (1, S, S, C)
    assert pos.shape == (1, H, W, C), (
        "learnable positional embedding assumes H == W == seq_len")
    Hm, Wm = H // 2, W // 2
    N = B * H * W
    Nm = B * Hm * Wm
    Dout = params["merge_w"].shape[0]
    num_blocks = params["wblk"].shape[0] // 4

    # Lane-dense channel-major, group-major token layout (cheap wrapper glue).
    x_cm = _to_merge_major_cm(x)                                          # (C, N)
    pos_cm = _to_merge_major_cm(jnp.broadcast_to(pos, (B, H, W, C)))      # (C, N)

    def full(a):
        nd = a.ndim
        return pl.BlockSpec(a.shape, lambda i, _nd=nd: (0,) * _nd)

    # Advisory cost so XLA can schedule/overlap this tiny custom call.
    flops = int(num_blocks * 4 * 2 * C * C * N          # block fc matmuls
                + 2 * Dout * 4 * C * Nm                 # merge reduction matmul
                + 30 * C * N * num_blocks)              # LN / GELU / adds (rough)
    transcendentals = int(num_blocks * 2 * C * N)       # erf per GELU element
    itemsize = x.dtype.itemsize
    bytes_accessed = int(
        sum(a.size * a.dtype.itemsize
            for a in (x_cm, pos_cm, params["wblk"], params["vecs"],
                      params["merge_w"]))
        + Dout * Nm * itemsize)

    out_cm = pl.pallas_call(
        make_stage_kernel(num_blocks, C, Nm),
        out_shape=jax.ShapeDtypeStruct((Dout, Nm), x.dtype),
        grid_spec=pltpu.PrefetchScalarGridSpec(
            num_scalar_prefetch=0,
            grid=(1,),   # single tile; add a leading "parallel" token-tile axis when batching up
            in_specs=[full(x_cm), full(pos_cm), full(params["wblk"]),
                      full(params["vecs"]), full(params["merge_w"])],
            out_specs=pl.BlockSpec((Dout, Nm), lambda i: (0, 0)),
        ),
        compiler_params=pltpu.CompilerParams(
            dimension_semantics=("arbitrary",)),
        cost_estimate=pl.CostEstimate(flops=flops,
                                      transcendentals=transcendentals,
                                      bytes_accessed=bytes_accessed),
    )(x_cm, pos_cm, params["wblk"], params["vecs"], params["merge_w"])

    return out_cm.T.reshape(B, Hm, Wm, Dout)


# ----------------------------------------------------------------------------
# Parameter construction (deterministic, synthetic; packed slabs)
# ----------------------------------------------------------------------------
def init_params(key, *, num_blocks, seq_len, d_model, d_ff, out_dim):
    assert d_ff == d_model, "packed slabs assume mlp_ratio == 1"
    C = d_model
    keys = iter(jax.random.split(key, 64))

    def lin(fan_out, fan_in):
        # PyTorch nn.Linear weight layout: (out_features, in_features)
        return 0.02 * jax.random.normal(next(keys), (fan_out, fan_in), jnp.float32)

    def vnoise(n, scale):
        return scale * jax.random.normal(next(keys), (n,), jnp.float32)

    # NOTE: real module init uses LN gamma=1/beta=0 and zero fc biases; small
    # random perturbations are added here so the reference check exercises
    # every column of the packed vector slab.
    wblk, cols = [], []
    for _ in range(num_blocks):
        wblk += [lin(d_ff, C),      # fc1
                 lin(C, d_ff),      # fc2
                 lin(d_ff, C),      # fc3
                 lin(C, d_ff)]      # fc4
        cols += [1.0 + vnoise(C, 0.05), vnoise(C, 0.05),    # ln1 gamma, beta
                 vnoise(d_ff, 0.02),    vnoise(C, 0.02),    # fc1 bias, fc2 bias
                 1.0 + vnoise(C, 0.05), vnoise(C, 0.05),    # ln2 gamma, beta
                 vnoise(d_ff, 0.02),    vnoise(C, 0.02)]    # fc3 bias, fc4 bias
    # merge LayerNorm gamma/beta over 4C channels, stored as 4 per-part chunks
    merge_gamma = 1.0 + vnoise(4 * C, 0.05)
    merge_beta = vnoise(4 * C, 0.05)
    cols += [merge_gamma[k * C:(k + 1) * C] for k in range(4)]
    cols += [merge_beta[k * C:(k + 1) * C] for k in range(4)]

    wblk = jnp.stack(wblk, axis=0)           # (nb*4, C, C)
    vecs = jnp.stack(cols, axis=1)           # (C, nb*8 + 8), channel-major columns

    # learnable positional embedding: trunc_normal std=0.2, shape (1, S, S, C)
    pos = 0.2 * jax.random.truncated_normal(
        next(keys), -2.0, 2.0, (1, seq_len, seq_len, C), jnp.float32)

    merge_w = lin(out_dim, 4 * C)            # (Dout, 4C), no bias

    return {"wblk": wblk, "vecs": vecs, "pos_emb": pos, "merge_w": merge_w}


# ----------------------------------------------------------------------------
# Pure-JAX (token-major) reference mirroring the PyTorch module
# ----------------------------------------------------------------------------
def basic_stage_reference(x, params):
    B, H, W, C = x.shape
    nb = params["wblk"].shape[0] // 4
    wb = params["wblk"]
    vec = params["vecs"]                       # (C, nb*8 + 8)
    x = x + params["pos_emb"]
    xt = x.reshape(B * H * W, C)
    for blk in range(nb):
        wo, vo = 4 * blk, 8 * blk
        h = _ln_lastdim(xt, vec[:, vo + 0], vec[:, vo + 1])
        h = _gelu_exact(h @ wb[wo + 0].T + vec[:, vo + 2])
        xt = xt + h @ wb[wo + 1].T + vec[:, vo + 3]
        h2 = _ln_lastdim(xt, vec[:, vo + 4], vec[:, vo + 5])
        h2 = _gelu_exact(h2 @ wb[wo + 2].T + vec[:, vo + 6])
        xt = xt + h2 @ wb[wo + 3].T + vec[:, vo + 7]
    x = xt.reshape(B, H, W, C)
    x0 = x[:, 0::2, 0::2, :]
    x1 = x[:, 1::2, 0::2, :]
    x2 = x[:, 0::2, 1::2, :]
    x3 = x[:, 1::2, 1::2, :]
    xm = jnp.concatenate([x0, x1, x2, x3], axis=-1)
    moff = 8 * nb
    gamma = jnp.concatenate([vec[:, moff + k] for k in range(4)], axis=0)
    beta = jnp.concatenate([vec[:, moff + 4 + k] for k in range(4)], axis=0)
    xm = _ln_lastdim(xm, gamma, beta)
    return xm @ params["merge_w"].T


if __name__ == "__main__":
    # small shapes: batch=2, seq_len=8 (H=W=8), d_model=32, mlp_ratio=1,
    # out_dim=64, num_blocks=2
    B, S, C = 2, 8, 32
    NUM_BLOCKS = 2
    D_FF = int(C * 1)        # mlp_ratio = 1
    OUT_DIM = 64

    key = jax.random.PRNGKey(0)
    kx, kp = jax.random.split(key)
    x = jax.random.normal(kx, (B, S, S, C), jnp.float32)
    params = init_params(kp, num_blocks=NUM_BLOCKS, seq_len=S,
                         d_model=C, d_ff=D_FF, out_dim=OUT_DIM)

    fwd = jax.jit(basic_stage_forward)
    out = fwd(x, params)
    jax.block_until_ready(out)
    assert out.shape == (B, S // 2, S // 2, OUT_DIM), out.shape

    ref = jax.jit(basic_stage_reference)(x, params)
    err = float(jnp.max(jnp.abs(out - ref)))
    # Bound is far below any layout/permutation-bug signature (O(0.1)) while
    # leaving headroom for Mosaic-vs-XLA f32 matmul precision-mode differences.
    assert err < 2e-3, f"kernel vs reference mismatch: {err}"
    print("KERNEL_OK")
</pallas_src>

<mosaic_0001>
module attributes {stable_mosaic.version = 11 : i64} {
  func.func @stage_kernel(%arg0: i32, %arg1: memref<32x128xf32, #tpu.memory_space<vmem>>, %arg2: memref<32x128xf32, #tpu.memory_space<vmem>>, %arg3: memref<8x32x32xf32, #tpu.memory_space<vmem>>, %arg4: memref<32x24xf32, #tpu.memory_space<vmem>>, %arg5: memref<64x128xf32, #tpu.memory_space<vmem>>, %arg6: memref<64x32xf32, #tpu.memory_space<vmem>>) attributes {dimension_semantics = [#tpu.dimension_semantics<arbitrary>], iteration_bounds = array<i64: 1>, scalar_prefetch = 0 : i64, scratch_operands = 0 : i64, tpu.core_type = #tpu.core_type<tc>, window_params = [{pipeline_mode = #tpu.pipeline_mode<synchronous>, transform_indices = @transform_0, window_bounds = array<i64: 32, 128>}, {pipeline_mode = #tpu.pipeline_mode<synchronous>, transform_indices = @transform_1, window_bounds = array<i64: 32, 128>}, {pipeline_mode = #tpu.pipeline_mode<synchronous>, transform_indices = @transform_2, window_bounds = array<i64: 8, 32, 32>}, {pipeline_mode = #tpu.pipeline_mode<synchronous>, transform_indices = @transform_3, window_bounds = array<i64: 32, 24>}, {pipeline_mode = #tpu.pipeline_mode<synchronous>, transform_indices = @transform_4, window_bounds = array<i64: 64, 128>}, {pipeline_mode = #tpu.pipeline_mode<synchronous>, transform_indices = @transform_5, window_bounds = array<i64: 64, 32>}]} {
    %c0 = arith.constant 0 : index
    %c0_0 = arith.constant 0 : index
    %0 = vector.load %arg4[%c0, %c0_0] : memref<32x24xf32, #tpu.memory_space<vmem>>, vector<32x24xf32>
    %c0_1 = arith.constant 0 : index
    %c0_2 = arith.constant 0 : index
    %1 = vector.load %arg1[%c0_1, %c0_2] : memref<32x128xf32, #tpu.memory_space<vmem>>, vector<32x128xf32>
    %c0_3 = arith.constant 0 : index
    %c0_4 = arith.constant 0 : index
    %2 = vector.load %arg2[%c0_3, %c0_4] : memref<32x128xf32, #tpu.memory_space<vmem>>, vector<32x128xf32>
    %3 = arith.addf %1, %2 : vector<32x128xf32>
    %4 = vector.extract_strided_slice %0 {offsets = [0, 0], sizes = [32, 1], strides = [1, 1]} : vector<32x24xf32> to vector<32x1xf32>
    %5 = vector.extract_strided_slice %0 {offsets = [0, 1], sizes = [32, 1], strides = [1, 1]} : vector<32x24xf32> to vector<32x1xf32>
    %cst = arith.constant dense<0.000000e+00> : vector<128xf32>
    %6 = vector.multi_reduction <add>, %3, %cst [0] : vector<32x128xf32> to vector<128xf32>
    %7 = vector.shape_cast %6 : vector<128xf32> to vector<1x128xf32>
    %cst_5 = arith.constant 3.200000e+01 : f32
    %8 = vector.broadcast %cst_5 : f32 to vector<1x128xf32>
    %9 = arith.divf %7, %8 : vector<1x128xf32>
    %10 = vector.broadcast %9 : vector<1x128xf32> to vector<32x128xf32>
    %11 = arith.subf %3, %10 : vector<32x128xf32>
    %12 = arith.mulf %11, %11 : vector<32x128xf32>
    %cst_6 = arith.constant dense<0.000000e+00> : vector<128xf32>
    %13 = vector.multi_reduction <add>, %12, %cst_6 [0] : vector<32x128xf32> to vector<128xf32>
    %14 = vector.shape_cast %13 : vector<128xf32> to vector<1x128xf32>
    %cst_7 = arith.constant 3.200000e+01 : f32
    %15 = vector.broadcast %cst_7 : f32 to vector<1x128xf32>
    %16 = arith.divf %14, %15 : vector<1x128xf32>
    %17 = vector.broadcast %9 : vector<1x128xf32> to vector<32x128xf32>
    %18 = arith.subf %3, %17 : vector<32x128xf32>
    %cst_8 = arith.constant 9.99999974E-6 : f32
    %19 = vector.broadcast %cst_8 : f32 to vector<1x128xf32>
    %20 = arith.addf %16, %19 : vector<1x128xf32>
    %21 = math.rsqrt %20 : vector<1x128xf32>
    %22 = vector.broadcast %21 : vector<1x128xf32> to vector<32x128xf32>
    %23 = arith.mulf %18, %22 : vector<32x128xf32>
    %24 = vector.broadcast %4 : vector<32x1xf32> to vector<32x128xf32>
    %25 = arith.mulf %23, %24 : vector<32x128xf32>
    %26 = vector.broadcast %5 : vector<32x1xf32> to vector<32x128xf32>
    %27 = arith.addf %25, %26 : vector<32x128xf32>
    %c0_9 = arith.constant 0 : index
    %c0_10 = arith.constant 0 : index
    %c0_11 = arith.constant 0 : index
    %28 = vector.load %arg3[%c0_9, %c0_10, %c0_11] : memref<8x32x32xf32, #tpu.memory_space<vmem>>, vector<1x32x32xf32>
    %29 = vector.shape_cast %28 : vector<1x32x32xf32> to vector<32x32xf32>
    %cst_12 = arith.constant dense<0.000000e+00> : vector<32x128xf32>
    %30 = tpu.matmul %29, %27, %cst_12 {dimension_numbers = #tpu.dot_dimension_numbers<[1], [0], [0], [1], [0, 0, 1, 1], [], []>} : vector<32x32xf32>, vector<32x128xf32>, vector<32x128xf32> -> vector<32x128xf32>
    %31 = vector.extract_strided_slice %0 {offsets = [0, 2], sizes = [32, 1], strides = [1, 1]} : vector<32x24xf32> to vector<32x1xf32>
    %32 = vector.broadcast %31 : vector<32x1xf32> to vector<32x128xf32>
    %33 = arith.addf %30, %32 : vector<32x128xf32>
    %cst_13 = arith.constant 5.000000e-01 : f32
    %34 = vector.broadcast %cst_13 : f32 to vector<32x128xf32>
    %35 = arith.mulf %34, %33 : vector<32x128xf32>
    %cst_14 = arith.constant 0.707106769 : f32
    %36 = vector.broadcast %cst_14 : f32 to vector<32x128xf32>
    %37 = arith.mulf %33, %36 : vector<32x128xf32>
    %38 = math.erf %37 : vector<32x128xf32>
    %cst_15 = arith.constant 1.000000e+00 : f32
    %39 = vector.broadcast %cst_15 : f32 to vector<32x128xf32>
    %40 = arith.addf %39, %38 : vector<32x128xf32>
    %41 = arith.mulf %35, %40 : vector<32x128xf32>
    %c1 = arith.constant 1 : index
    %c0_16 = arith.constant 0 : index
    %c0_17 = arith.constant 0 : index
    %42 = vector.load %arg3[%c1, %c0_16, %c0_17] : memref<8x32x32xf32, #tpu.memory_space<vmem>>, vector<1x32x32xf32>
    %43 = vector.shape_cast %42 : vector<1x32x32xf32> to vector<32x32xf32>
    %cst_18 = arith.constant dense<0.000000e+00> : vector<32x128xf32>
    %44 = tpu.matmul %43, %41, %cst_18 {dimension_numbers = #tpu.dot_dimension_numbers<[1], [0], [0], [1], [0, 0, 1, 1], [], []>} : vector<32x32xf32>, vector<32x128xf32>, vector<32x128xf32> -> vector<32x128xf32>
    %45 = arith.addf %3, %44 : vector<32x128xf32>
    %46 = vector.extract_strided_slice %0 {offsets = [0, 3], sizes = [32, 1], strides = [1, 1]} : vector<32x24xf32> to vector<32x1xf32>
    %47 = vector.broadcast %46 : vector<32x1xf32> to vector<32x128xf32>
    %48 = arith.addf %45, %47 : vector<32x128xf32>
    %49 = vector.extract_strided_slice %0 {offsets = [0, 4], sizes = [32, 1], strides = [1, 1]} : vector<32x24xf32> to vector<32x1xf32>
    %50 = vector.extract_strided_slice %0 {offsets = [0, 5], sizes = [32, 1], strides = [1, 1]} : vector<32x24xf32> to vector<32x1xf32>
    %cst_19 = arith.constant dense<0.000000e+00> : vector<128xf32>
    %51 = vector.multi_reduction <add>, %48, %cst_19 [0] : vector<32x128xf32> to vector<128xf32>
    %52 = vector.shape_cast %51 : vector<128xf32> to vector<1x128xf32>
    %cst_20 = arith.constant 3.200000e+01 : f32
    %53 = vector.broadcast %cst_20 : f32 to vector<1x128xf32>
    %54 = arith.divf %52, %53 : vector<1x128xf32>
    %55 = vector.broadcast %54 : vector<1x128xf32> to vector<32x128xf32>
    %56 = arith.subf %48, %55 : vector<32x128xf32>
    %57 = arith.mulf %56, %56 : vector<32x128xf32>
    %cst_21 = arith.constant dense<0.000000e+00> : vector<128xf32>
    %58 = vector.multi_reduction <add>, %57, %cst_21 [0] : vector<32x128xf32> to vector<128xf32>
    %59 = vector.shape_cast %58 : vector<128xf32> to vector<1x128xf32>
    %cst_22 = arith.constant 3.200000e+01 : f32
    %60 = vector.broadcast %cst_22 : f32 to vector<1x128xf32>
    %61 = arith.divf %59, %60 : vector<1x128xf32>
    %62 = vector.broadcast %54 : vector<1x128xf32> to vector<32x128xf32>
    %63 = arith.subf %48, %62 : vector<32x128xf32>
    %cst_23 = arith.constant 9.99999974E-6 : f32
    %64 = vector.broadcast %cst_23 : f32 to vector<1x128xf32>
    %65 = arith.addf %61, %64 : vector<1x128xf32>
    %66 = math.rsqrt %65 : vector<1x128xf32>
    %67 = vector.broadcast %66 : vector<1x128xf32> to vector<32x128xf32>
    %68 = arith.mulf %63, %67 : vector<32x128xf32>
    %69 = vector.broadcast %49 : vector<32x1xf32> to vector<32x128xf32>
    %70 = arith.mulf %68, %69 : vector<32x128xf32>
    %71 = vector.broadcast %50 : vector<32x1xf32> to vector<32x128xf32>
    %72 = arith.addf %70, %71 : vector<32x128xf32>
    %c2 = arith.constant 2 : index
    %c0_24 = arith.constant 0 : index
    %c0_25 = arith.constant 0 : index
    %73 = vector.load %arg3[%c2, %c0_24, %c0_25] : memref<8x32x32xf32, #tpu.memory_space<vmem>>, vector<1x32x32xf32>
    %74 = vector.shape_cast %73 : vector<1x32x32xf32> to vector<32x32xf32>
    %cst_26 = arith.constant dense<0.000000e+00> : vector<32x128xf32>
    %75 = tpu.matmul %74, %72, %cst_26 {dimension_numbers = #tpu.dot_dimension_numbers<[1], [0], [0], [1], [0, 0, 1, 1], [], []>} : vector<32x32xf32>, vector<32x128xf32>, vector<32x128xf32> -> vector<32x128xf32>
    %76 = vector.extract_strided_slice %0 {offsets = [0, 6], sizes = [32, 1], strides = [1, 1]} : vector<32x24xf32> to vector<32x1xf32>
    %77 = vector.broadcast %76 : vector<32x1xf32> to vector<32x128xf32>
    %78 = arith.addf %75, %77 : vector<32x128xf32>
    %cst_27 = arith.constant 5.000000e-01 : f32
    %79 = vector.broadcast %cst_27 : f32 to vector<32x128xf32>
    %80 = arith.mulf %79, %78 : vector<32x128xf32>
    %cst_28 = arith.constant 0.707106769 : f32
    %81 = vector.broadcast %cst_28 : f32 to vector<32x128xf32>
    %82 = arith.mulf %78, %81 : vector<32x128xf32>
    %83 = math.erf %82 : vector<32x128xf32>
    %cst_29 = arith.constant 1.000000e+00 : f32
    %84 = vector.broadcast %cst_29 : f32 to vector<32x128xf32>
    %85 = arith.addf %84, %83 : vector<32x128xf32>
    %86 = arith.mulf %80, %85 : vector<32x128xf32>
    %c3 = arith.constant 3 : index
    %c0_30 = arith.constant 0 : index
    %c0_31 = arith.constant 0 : index
    %87 = vector.load %arg3[%c3, %c0_30, %c0_31] : memref<8x32x32xf32, #tpu.memory_space<vmem>>, vector<1x32x32xf32>
    %88 = vector.shape_cast %87 : vector<1x32x32xf32> to vector<32x32xf32>
    %cst_32 = arith.constant dense<0.000000e+00> : vector<32x128xf32>
    %89 = tpu.matmul %88, %86, %cst_32 {dimension_numbers = #tpu.dot_dimension_numbers<[1], [0], [0], [1], [0, 0, 1, 1], [], []>} : vector<32x32xf32>, vector<32x128xf32>, vector<32x128xf32> -> vector<32x128xf32>
    %90 = arith.addf %48, %89 : vector<32x128xf32>
    %91 = vector.extract_strided_slice %0 {offsets = [0, 7], sizes = [32, 1], strides = [1, 1]} : vector<32x24xf32> to vector<32x1xf32>
    %92 = vector.broadcast %91 : vector<32x1xf32> to vector<32x128xf32>
    %93 = arith.addf %90, %92 : vector<32x128xf32>
    %94 = vector.extract_strided_slice %0 {offsets = [0, 8], sizes = [32, 1], strides = [1, 1]} : vector<32x24xf32> to vector<32x1xf32>
    %95 = vector.extract_strided_slice %0 {offsets = [0, 9], sizes = [32, 1], strides = [1, 1]} : vector<32x24xf32> to vector<32x1xf32>
    %cst_33 = arith.constant dense<0.000000e+00> : vector<128xf32>
    %96 = vector.multi_reduction <add>, %93, %cst_33 [0] : vector<32x128xf32> to vector<128xf32>
    %97 = vector.shape_cast %96 : vector<128xf32> to vector<1x128xf32>
    %cst_34 = arith.constant 3.200000e+01 : f32
    %98 = vector.broadcast %cst_34 : f32 to vector<1x128xf32>
    %99 = arith.divf %97, %98 : vector<1x128xf32>
    %100 = vector.broadcast %99 : vector<1x128xf32> to vector<32x128xf32>
    %101 = arith.subf %93, %100 : vector<32x128xf32>
    %102 = arith.mulf %101, %101 : vector<32x128xf32>
    %cst_35 = arith.constant dense<0.000000e+00> : vector<128xf32>
    %103 = vector.multi_reduction <add>, %102, %cst_35 [0] : vector<32x128xf32> to vector<128xf32>
    %104 = vector.shape_cast %103 : vector<128xf32> to vector<1x128xf32>
    %cst_36 = arith.constant 3.200000e+01 : f32
    %105 = vector.broadcast %cst_36 : f32 to vector<1x128xf32>
    %106 = arith.divf %104, %105 : vector<1x128xf32>
    %107 = vector.broadcast %99 : vector<1x128xf32> to vector<32x128xf32>
    %108 = arith.subf %93, %107 : vector<32x128xf32>
    %cst_37 = arith.constant 9.99999974E-6 : f32
    %109 = vector.broadcast %cst_37 : f32 to vector<1x128xf32>
    %110 = arith.addf %106, %109 : vector<1x128xf32>
    %111 = math.rsqrt %110 : vector<1x128xf32>
    %112 = vector.broadcast %111 : vector<1x128xf32> to vector<32x128xf32>
    %113 = arith.mulf %108, %112 : vector<32x128xf32>
    %114 = vector.broadcast %94 : vector<32x1xf32> to vector<32x128xf32>
    %115 = arith.mulf %113, %114 : vector<32x128xf32>
    %116 = vector.broadcast %95 : vector<32x1xf32> to vector<32x128xf32>
    %117 = arith.addf %115, %116 : vector<32x128xf32>
    %c4 = arith.constant 4 : index
    %c0_38 = arith.constant 0 : index
    %c0_39 = arith.constant 0 : index
    %118 = vector.load %arg3[%c4, %c0_38, %c0_39] : memref<8x32x32xf32, #tpu.memory_space<vmem>>, vector<1x32x32xf32>
    %119 = vector.shape_cast %118 : vector<1x32x32xf32> to vector<32x32xf32>
    %cst_40 = arith.constant dense<0.000000e+00> : vector<32x128xf32>
    %120 = tpu.matmul %119, %117, %cst_40 {dimension_numbers = #tpu.dot_dimension_numbers<[1], [0], [0], [1], [0, 0, 1, 1], [], []>} : vector<32x32xf32>, vector<32x128xf32>, vector<32x128xf32> -> vector<32x128xf32>
    %121 = vector.extract_strided_slice %0 {offsets = [0, 10], sizes = [32, 1], strides = [1, 1]} : vector<32x24xf32> to vector<32x1xf32>
    %122 = vector.broadcast %121 : vector<32x1xf32> to vector<32x128xf32>
    %123 = arith.addf %120, %122 : vector<32x128xf32>
    %cst_41 = arith.constant 5.000000e-01 : f32
    %124 = vector.broadcast %cst_41 : f32 to vector<32x128xf32>
    %125 = arith.mulf %124, %123 : vector<32x128xf32>
    %cst_42 = arith.constant 0.707106769 : f32
    %126 = vector.broadcast %cst_42 : f32 to vector<32x128xf32>
    %127 = arith.mulf %123, %126 : vector<32x128xf32>
    %128 = math.erf %127 : vector<32x128xf32>
    %cst_43 = arith.constant 1.000000e+00 : f32
    %129 = vector.broadcast %cst_43 : f32 to vector<32x128xf32>
    %130 = arith.addf %129, %128 : vector<32x128xf32>
    %131 = arith.mulf %125, %130 : vector<32x128xf32>
    %c5 = arith.constant 5 : index
    %c0_44 = arith.constant 0 : index
    %c0_45 = arith.constant 0 : index
    %132 = vector.load %arg3[%c5, %c0_44, %c0_45] : memref<8x32x32xf32, #tpu.memory_space<vmem>>, vector<1x32x32xf32>
    %133 = vector.shape_cast %132 : vector<1x32x32xf32> to vector<32x32xf32>
    %cst_46 = arith.constant dense<0.000000e+00> : vector<32x128xf32>
    %134 = tpu.matmul %133, %131, %cst_46 {dimension_numbers = #tpu.dot_dimension_numbers<[1], [0], [0], [1], [0, 0, 1, 1], [], []>} : vector<32x32xf32>, vector<32x128xf32>, vector<32x128xf32> -> vector<32x128xf32>
    %135 = arith.addf %93, %134 : vector<32x128xf32>
    %136 = vector.extract_strided_slice %0 {offsets = [0, 11], sizes = [32, 1], strides = [1, 1]} : vector<32x24xf32> to vector<32x1xf32>
    %137 = vector.broadcast %136 : vector<32x1xf32> to vector<32x128xf32>
    %138 = arith.addf %135, %137 : vector<32x128xf32>
    %139 = vector.extract_strided_slice %0 {offsets = [0, 12], sizes = [32, 1], strides = [1, 1]} : vector<32x24xf32> to vector<32x1xf32>
    %140 = vector.extract_strided_slice %0 {offsets = [0, 13], sizes = [32, 1], strides = [1, 1]} : vector<32x24xf32> to vector<32x1xf32>
    %cst_47 = arith.constant dense<0.000000e+00> : vector<128xf32>
    %141 = vector.multi_reduction <add>, %138, %cst_47 [0] : vector<32x128xf32> to vector<128xf32>
    %142 = vector.shape_cast %141 : vector<128xf32> to vector<1x128xf32>
    %cst_48 = arith.constant 3.200000e+01 : f32
    %143 = vector.broadcast %cst_48 : f32 to vector<1x128xf32>
    %144 = arith.divf %142, %143 : vector<1x128xf32>
    %145 = vector.broadcast %144 : vector<1x128xf32> to vector<32x128xf32>
    %146 = arith.subf %138, %145 : vector<32x128xf32>
    %147 = arith.mulf %146, %146 : vector<32x128xf32>
    %cst_49 = arith.constant dense<0.000000e+00> : vector<128xf32>
    %148 = vector.multi_reduction <add>, %147, %cst_49 [0] : vector<32x128xf32> to vector<128xf32>
    %149 = vector.shape_cast %148 : vector<128xf32> to vector<1x128xf32>
    %cst_50 = arith.constant 3.200000e+01 : f32
    %150 = vector.broadcast %cst_50 : f32 to vector<1x128xf32>
    %151 = arith.divf %149, %150 : vector<1x128xf32>
    %152 = vector.broadcast %144 : vector<1x128xf32> to vector<32x128xf32>
    %153 = arith.subf %138, %152 : vector<32x128xf32>
    %cst_51 = arith.constant 9.99999974E-6 : f32
    %154 = vector.broadcast %cst_51 : f32 to vector<1x128xf32>
    %155 = arith.addf %151, %154 : vector<1x128xf32>
    %156 = math.rsqrt %155 : vector<1x128xf32>
    %157 = vector.broadcast %156 : vector<1x128xf32> to vector<32x128xf32>
    %158 = arith.mulf %153, %157 : vector<32x128xf32>
    %159 = vector.broadcast %139 : vector<32x1xf32> to vector<32x128xf32>
    %160 = arith.mulf %158, %159 : vector<32x128xf32>
    %161 = vector.broadcast %140 : vector<32x1xf32> to vector<32x128xf32>
    %162 = arith.addf %160, %161 : vector<32x128xf32>
    %c6 = arith.constant 6 : index
    %c0_52 = arith.constant 0 : index
    %c0_53 = arith.constant 0 : index
    %163 = vector.load %arg3[%c6, %c0_52, %c0_53] : memref<8x32x32xf32, #tpu.memory_space<vmem>>, vector<1x32x32xf32>
    %164 = vector.shape_cast %163 : vector<1x32x32xf32> to vector<32x32xf32>
    %cst_54 = arith.constant dense<0.000000e+00> : vector<32x128xf32>
    %165 = tpu.matmul %164, %162, %cst_54 {dimension_numbers = #tpu.dot_dimension_numbers<[1], [0], [0], [1], [0, 0, 1, 1], [], []>} : vector<32x32xf32>, vector<32x128xf32>, vector<32x128xf32> -> vector<32x128xf32>
    %166 = vector.extract_strided_slice %0 {offsets = [0, 14], sizes = [32, 1], strides = [1, 1]} : vector<32x24xf32> to vector<32x1xf32>
    %167 = vector.broadcast %166 : vector<32x1xf32> to vector<32x128xf32>
    %168 = arith.addf %165, %167 : vector<32x128xf32>
    %cst_55 = arith.constant 5.000000e-01 : f32
    %169 = vector.broadcast %cst_55 : f32 to vector<32x128xf32>
    %170 = arith.mulf %169, %168 : vector<32x128xf32>
    %cst_56 = arith.constant 0.707106769 : f32
    %171 = vector.broadcast %cst_56 : f32 to vector<32x128xf32>
    %172 = arith.mulf %168, %171 : vector<32x128xf32>
    %173 = math.erf %172 : vector<32x128xf32>
    %cst_57 = arith.constant 1.000000e+00 : f32
    %174 = vector.broadcast %cst_57 : f32 to vector<32x128xf32>
    %175 = arith.addf %174, %173 : vector<32x128xf32>
    %176 = arith.mulf %170, %175 : vector<32x128xf32>
    %c7 = arith.constant 7 : index
    %c0_58 = arith.constant 0 : index
    %c0_59 = arith.constant 0 : index
    %177 = vector.load %arg3[%c7, %c0_58, %c0_59] : memref<8x32x32xf32, #tpu.memory_space<vmem>>, vector<1x32x32xf32>
    %178 = vector.shape_cast %177 : vector<1x32x32xf32> to vector<32x32xf32>
    %cst_60 = arith.constant dense<0.000000e+00> : vector<32x128xf32>
    %179 = tpu.matmul %178, %176, %cst_60 {dimension_numbers = #tpu.dot_dimension_numbers<[1], [0], [0], [1], [0, 0, 1, 1], [], []>} : vector<32x32xf32>, vector<32x128xf32>, vector<32x128xf32> -> vector<32x128xf32>
    %180 = arith.addf %138, %179 : vector<32x128xf32>
    %181 = vector.extract_strided_slice %0 {offsets = [0, 15], sizes = [32, 1], strides = [1, 1]} : vector<32x24xf32> to vector<32x1xf32>
    %182 = vector.broadcast %181 : vector<32x1xf32> to vector<32x128xf32>
    %183 = arith.addf %180, %182 : vector<32x128xf32>
    %184 = vector.extract_strided_slice %183 {offsets = [0, 0], sizes = [32, 32], strides = [1, 1]} : vector<32x128xf32> to vector<32x32xf32>
    %185 = vector.extract_strided_slice %183 {offsets = [0, 32], sizes = [32, 32], strides = [1, 1]} : vector<32x128xf32> to vector<32x32xf32>
    %186 = vector.extract_strided_slice %183 {offsets = [0, 64], sizes = [32, 32], strides = [1, 1]} : vector<32x128xf32> to vector<32x32xf32>
    %187 = vector.extract_strided_slice %183 {offsets = [0, 96], sizes = [32, 32], strides = [1, 1]} : vector<32x128xf32> to vector<32x32xf32>
    %cst_61 = arith.constant dense<0.000000e+00> : vector<32xf32>
    %188 = vector.multi_reduction <add>, %184, %cst_61 [0] : vector<32x32xf32> to vector<32xf32>
    %189 = vector.shape_cast %188 : vector<32xf32> to vector<1x32xf32>
    %cst_62 = arith.constant 0.000000e+00 : f32
    %190 = vector.broadcast %cst_62 : f32 to vector<1x32xf32>
    %191 = arith.addf %190, %189 : vector<1x32xf32>
    %cst_63 = arith.constant dense<0.000000e+00> : vector<32xf32>
    %192 = vector.multi_reduction <add>, %185, %cst_63 [0] : vector<32x32xf32> to vector<32xf32>
    %193 = vector.shape_cast %192 : vector<32xf32> to vector<1x32xf32>
    %194 = arith.addf %191, %193 : vector<1x32xf32>
    %cst_64 = arith.constant dense<0.000000e+00> : vector<32xf32>
    %195 = vector.multi_reduction <add>, %186, %cst_64 [0] : vector<32x32xf32> to vector<32xf32>
    %196 = vector.shape_cast %195 : vector<32xf32> to vector<1x32xf32>
    %197 = arith.addf %194, %196 : vector<1x32xf32>
    %cst_65 = arith.constant dense<0.000000e+00> : vector<32xf32>
    %198 = vector.multi_reduction <add>, %187, %cst_65 [0] : vector<32x32xf32> to vector<32xf32>
    %199 = vector.shape_cast %198 : vector<32xf32> to vector<1x32xf32>
    %200 = arith.addf %197, %199 : vector<1x32xf32>
    %cst_66 = arith.constant 7.812500e-03 : f32
    %201 = vector.broadcast %cst_66 : f32 to vector<1x32xf32>
    %202 = arith.mulf %200, %201 : vector<1x32xf32>
    %203 = vector.broadcast %202 : vector<1x32xf32> to vector<32x32xf32>
    %204 = arith.subf %184, %203 : vector<32x32xf32>
    %205 = arith.mulf %204, %204 : vector<32x32xf32>
    %cst_67 = arith.constant dense<0.000000e+00> : vector<32xf32>
    %206 = vector.multi_reduction <add>, %205, %cst_67 [0] : vector<32x32xf32> to vector<32xf32>
    %207 = vector.shape_cast %206 : vector<32xf32> to vector<1x32xf32>
    %cst_68 = arith.constant 0.000000e+00 : f32
    %208 = vector.broadcast %cst_68 : f32 to vector<1x32xf32>
    %209 = arith.addf %208, %207 : vector<1x32xf32>
    %210 = vector.broadcast %202 : vector<1x32xf32> to vector<32x32xf32>
    %211 = arith.subf %185, %210 : vector<32x32xf32>
    %212 = arith.mulf %211, %211 : vector<32x32xf32>
    %cst_69 = arith.constant dense<0.000000e+00> : vector<32xf32>
    %213 = vector.multi_reduction <add>, %212, %cst_69 [0] : vector<32x32xf32> to vector<32xf32>
    %214 = vector.shape_cast %213 : vector<32xf32> to vector<1x32xf32>
    %215 = arith.addf %209, %214 : vector<1x32xf32>
    %216 = vector.broadcast %202 : vector<1x32xf32> to vector<32x32xf32>
    %217 = arith.subf %186, %216 : vector<32x32xf32>
    %218 = arith.mulf %217, %217 : vector<32x32xf32>
    %cst_70 = arith.constant dense<0.000000e+00> : vector<32xf32>
    %219 = vector.multi_reduction <add>, %218, %cst_70 [0] : vector<32x32xf32> to vector<32xf32>
    %220 = vector.shape_cast %219 : vector<32xf32> to vector<1x32xf32>
    %221 = arith.addf %215, %220 : vector<1x32xf32>
    %222 = vector.broadcast %202 : vector<1x32xf32> to vector<32x32xf32>
    %223 = arith.subf %187, %222 : vector<32x32xf32>
    %224 = arith.mulf %223, %223 : vector<32x32xf32>
    %cst_71 = arith.constant dense<0.000000e+00> : vector<32xf32>
    %225 = vector.multi_reduction <add>, %224, %cst_71 [0] : vector<32x32xf32> to vector<32xf32>
    %226 = vector.shape_cast %225 : vector<32xf32> to vector<1x32xf32>
    %227 = arith.addf %221, %226 : vector<1x32xf32>
    %cst_72 = arith.constant 7.812500e-03 : f32
    %228 = vector.broadcast %cst_72 : f32 to vector<1x32xf32>
    %229 = arith.mulf %227, %228 : vector<1x32xf32>
    %cst_73 = arith.constant 9.99999974E-6 : f32
    %230 = vector.broadcast %cst_73 : f32 to vector<1x32xf32>
    %231 = arith.addf %229, %230 : vector<1x32xf32>
    %232 = math.rsqrt %231 : vector<1x32xf32>
    %233 = vector.broadcast %202 : vector<1x32xf32> to vector<32x32xf32>
    %234 = arith.subf %184, %233 : vector<32x32xf32>
    %235 = vector.broadcast %232 : vector<1x32xf32> to vector<32x32xf32>
    %236 = arith.mulf %234, %235 : vector<32x32xf32>
    %237 = vector.extract_strided_slice %0 {offsets = [0, 16], sizes = [32, 1], strides = [1, 1]} : vector<32x24xf32> to vector<32x1xf32>
    %238 = vector.broadcast %237 : vector<32x1xf32> to vector<32x32xf32>
    %239 = arith.mulf %236, %238 : vector<32x32xf32>
    %240 = vector.extract_strided_slice %0 {offsets = [0, 20], sizes = [32, 1], strides = [1, 1]} : vector<32x24xf32> to vector<32x1xf32>
    %241 = vector.broadcast %240 : vector<32x1xf32> to vector<32x32xf32>
    %242 = arith.addf %239, %241 : vector<32x32xf32>
    %243 = vector.broadcast %202 : vector<1x32xf32> to vector<32x32xf32>
    %244 = arith.subf %185, %243 : vector<32x32xf32>
    %245 = vector.broadcast %232 : vector<1x32xf32> to vector<32x32xf32>
    %246 = arith.mulf %244, %245 : vector<32x32xf32>
    %247 = vector.extract_strided_slice %0 {offsets = [0, 17], sizes = [32, 1], strides = [1, 1]} : vector<32x24xf32> to vector<32x1xf32>
    %248 = vector.broadcast %247 : vector<32x1xf32> to vector<32x32xf32>
    %249 = arith.mulf %246, %248 : vector<32x32xf32>
    %250 = vector.extract_strided_slice %0 {offsets = [0, 21], sizes = [32, 1], strides = [1, 1]} : vector<32x24xf32> to vector<32x1xf32>
    %251 = vector.broadcast %250 : vector<32x1xf32> to vector<32x32xf32>
    %252 = arith.addf %249, %251 : vector<32x32xf32>
    %253 = vector.broadcast %202 : vector<1x32xf32> to vector<32x32xf32>
    %254 = arith.subf %186, %253 : vector<32x32xf32>
    %255 = vector.broadcast %232 : vector<1x32xf32> to vector<32x32xf32>
    %256 = arith.mulf %254, %255 : vector<32x32xf32>
    %257 = vector.extract_strided_slice %0 {offsets = [0, 18], sizes = [32, 1], strides = [1, 1]} : vector<32x24xf32> to vector<32x1xf32>
    %258 = vector.broadcast %257 : vector<32x1xf32> to vector<32x32xf32>
    %259 = arith.mulf %256, %258 : vector<32x32xf32>
    %260 = vector.extract_strided_slice %0 {offsets = [0, 22], sizes = [32, 1], strides = [1, 1]} : vector<32x24xf32> to vector<32x1xf32>
    %261 = vector.broadcast %260 : vector<32x1xf32> to vector<32x32xf32>
    %262 = arith.addf %259, %261 : vector<32x32xf32>
    %263 = vector.broadcast %202 : vector<1x32xf32> to vector<32x32xf32>
    %264 = arith.subf %187, %263 : vector<32x32xf32>
    %265 = vector.broadcast %232 : vector<1x32xf32> to vector<32x32xf32>
    %266 = arith.mulf %264, %265 : vector<32x32xf32>
    %267 = vector.extract_strided_slice %0 {offsets = [0, 19], sizes = [32, 1], strides = [1, 1]} : vector<32x24xf32> to vector<32x1xf32>
    %268 = vector.broadcast %267 : vector<32x1xf32> to vector<32x32xf32>
    %269 = arith.mulf %266, %268 : vector<32x32xf32>
    %270 = vector.extract_strided_slice %0 {offsets = [0, 23], sizes = [32, 1], strides = [1, 1]} : vector<32x24xf32> to vector<32x1xf32>
    %271 = vector.broadcast %270 : vector<32x1xf32> to vector<32x32xf32>
    %272 = arith.addf %269, %271 : vector<32x32xf32>
    %273 = tpu.concatenate %242, %252, %262, %272 in 0 : vector<32x32xf32>, vector<32x32xf32>, vector<32x32xf32>, vector<32x32xf32> -> vector<128x32xf32>
    %c0_74 = arith.constant 0 : index
    %c0_75 = arith.constant 0 : index
    %274 = vector.load %arg5[%c0_74, %c0_75] : memref<64x128xf32, #tpu.memory_space<vmem>>, vector<64x128xf32>
    %cst_76 = arith.constant dense<0.000000e+00> : vector<64x32xf32>
    %275 = tpu.matmul %274, %273, %cst_76 {dimension_numbers = #tpu.dot_dimension_numbers<[1], [0], [0], [1], [0, 0, 1, 1], [], []>} : vector<64x128xf32>, vector<128x32xf32>, vector<64x32xf32> -> vector<64x32xf32>
    %c0_77 = arith.constant 0 : index
    %c0_78 = arith.constant 0 : index
    %276 = vector.load %arg6[%c0_77, %c0_78] : memref<64x32xf32, #tpu.memory_space<vmem>>, vector<64x32xf32>
    tpu.vector_store %arg6[%c0_77, %c0_78], %275 {strides = array<i32>} : memref<64x32xf32, #tpu.memory_space<vmem>>, vector<64x32xf32>,
    return
  }
  func.func @transform_0(%arg0: i32) -> (i32, i32) {
    %c0_i32 = arith.constant 0 : i32
    %c0_i32_0 = arith.constant 0 : i32
    %c0_i32_1 = arith.constant 0 : i32
    return %c0_i32, %c0_i32_0 : i32, i32
  }
  func.func @transform_1(%arg0: i32) -> (i32, i32) {
    %c0_i32 = arith.constant 0 : i32
    %c0_i32_0 = arith.constant 0 : i32
    %c0_i32_1 = arith.constant 0 : i32
    return %c0_i32, %c0_i32_0 : i32, i32
  }
  func.func @transform_2(%arg0: i32) -> (i32, i32, i32) {
    %c0_i32 = arith.constant 0 : i32
    %c0_i32_0 = arith.constant 0 : i32
    %c0_i32_1 = arith.constant 0 : i32
    %c0_i32_2 = arith.constant 0 : i32
    return %c0_i32, %c0_i32_0, %c0_i32_1 : i32, i32, i32
  }
  func.func @transform_3(%arg0: i32) -> (i32, i32) {
    %c0_i32 = arith.constant 0 : i32
    %c0_i32_0 = arith.constant 0 : i32
    %c0_i32_1 = arith.constant 0 : i32
    return %c0_i32, %c0_i32_0 : i32, i32
  }
  func.func @transform_4(%arg0: i32) -> (i32, i32) {
    %c0_i32 = arith.constant 0 : i32
    %c0_i32_0 = arith.constant 0 : i32
    %c0_i32_1 = arith.constant 0 : i32
    return %c0_i32, %c0_i32_0 : i32, i32
  }
  func.func @transform_5(%arg0: i32) -> (i32, i32) {
    %c0_i32 = arith.constant 0 : i32
    %c0_i32_0 = arith.constant 0 : i32
    %c0_i32_1 = arith.constant 0 : i32
    return %c0_i32, %c0_i32_0 : i32, i32
  }
}

</mosaic_0001>

<llo_original>
// kernel: basic_stage_forward.1
$region0: #{basic_stage_forward.1}
  #allocation0 [shape = 'u32[]', space=smem, size = 0x4, offset = 0x4, fixed_abs, tag = 'smem constant byte address 0x4 - core index']
  #allocation1 [shape = 'u32[144,128]{1,0:T(1,128)}', space=vmem, size = 0x12000, scoped, tag = 'internal scratch']
  %s0 = inlined_call_operand.vmem [shape: f32[32,128], index: 0, kind: input, shape index: {}]
  %s1 = inlined_call_operand.vmem [shape: f32[32,128], index: 1, kind: input, shape index: {}]
  %s2 = inlined_call_operand.vmem [shape: f32[8,32,32], index: 2, kind: input, shape index: {}]
  %s3 = inlined_call_operand.vmem [shape: f32[32,24], index: 3, kind: input, shape index: {}]
  %s4 = inlined_call_operand.vmem [shape: f32[64,128], index: 4, kind: input, shape index: {}]
  %s5 = inlined_call_operand.vmem [shape: f32[64,32], index: 5, kind: output, shape index: {}]
  %s6 = sld [smem:[#allocation0]]
  $region30: #{basic_stage_forward.1} parent=0
    _
  %s8 = ssub.s32 1, %s6
  %s9 = scalar_select 0, %s8, %s6
  // Predicated region
  $region2: #{basic_stage_forward.1} parent=0 // pred_check
    _
  $region3: #{basic_stage_forward.1} parent=0 // pred_check_branch
    %11 = sbr.rel (0) target = $region5
  $region4: #{basic_stage_forward.1} parent=0 // pred_region
    _
  $region5: #{basic_stage_forward.1} parent=0 // pred_fallthru
    _
  // Predicated region
  $region6: #{basic_stage_forward.1} parent=0 // pred_check
    _
  $region7: #{basic_stage_forward.1} parent=0 // pred_check_branch
    %13 = sbr.rel (0) target = $region9
  $region8: #{basic_stage_forward.1} parent=0 // pred_region
    _
  $region9: #{basic_stage_forward.1} parent=0 // pred_fallthru
    _
  // Predicated region
  $region10: #{basic_stage_forward.1} parent=0 // pred_check
    _
  $region11: #{basic_stage_forward.1} parent=0 // pred_check_branch
    %15 = sbr.rel (0) target = $region13
  $region12: #{basic_stage_forward.1} parent=0 // pred_region
    _
  $region13: #{basic_stage_forward.1} parent=0 // pred_fallthru
    _
  // Predicated region
  $region14: #{basic_stage_forward.1} parent=0 // pred_check
    _
  $region15: #{basic_stage_forward.1} parent=0 // pred_check_branch
    %17 = sbr.rel (0) target = $region17
  $region16: #{basic_stage_forward.1} parent=0 // pred_region
    _
  $region17: #{basic_stage_forward.1} parent=0 // pred_fallthru
    _
  // Predicated region
  $region18: #{basic_stage_forward.1} parent=0 // pred_check
    _
  $region19: #{basic_stage_forward.1} parent=0 // pred_check_branch
    %19 = sbr.rel (0) target = $region21
  $region20: #{basic_stage_forward.1} parent=0 // pred_region
    _
  $region21: #{basic_stage_forward.1} parent=0 // pred_fallthru
    _
  %v20 = vld [vmem:[%s3] sm:$0xff]
  %v21 = vld [vmem:[%s3 + $0x8] sm:$0xff]
  %v22 = vld [vmem:[%s3 + $0x10] sm:$0xff]
  %v23 = vld [vmem:[%s3 + $0x18] sm:$0xff]
  %v24 = vld [vmem:[%s0] sm:$0xff]
  %v25 = vld [vmem:[%s0 + $0x8] sm:$0xff]
  %v26 = vld [vmem:[%s0 + $0x10] sm:$0xff]
  %v27 = vld [vmem:[%s0 + $0x18] sm:$0xff]
  %v28 = vld [vmem:[%s1] sm:$0xff]
  %v29 = vld [vmem:[%s1 + $0x8] sm:$0xff]
  %v30 = vld [vmem:[%s1 + $0x10] sm:$0xff]
  %v31 = vld [vmem:[%s1 + $0x18] sm:$0xff]
  %v32 = vadd.f32 %v24, %v28
  %v33 = vadd.f32 %v25, %v29
  %v34 = vadd.f32 %v26, %v30
  %v35 = vadd.f32 %v27, %v31
  %v36 = vadd.f32 %v32, %v33
  %v37 = vadd.f32 %v36, %v34
  %v38 = vadd.f32 %v37, %v35
  %v39 = vrot.slane %v38, 4
  %v40 = vadd.f32 %v38, %v39
  %v41 = vrot.slane %v40, 2
  %v42 = vadd.f32 %v40, %v41
  %v43 = vrot.slane %v42, 1
  %v44 = vadd.f32 %v42, %v43
  %v45 = vrcp.pop 32.0
  %v46 = vmul.f32 %v44, %v45
  %v47 = vsub.f32 %v32, %v46
  %v48 = vsub.f32 %v33, %v46
  %v49 = vsub.f32 %v34, %v46
  %v50 = vsub.f32 %v35, %v46
  %v51 = vmul.f32 %v47, %v47
  %v52 = vmul.f32 %v48, %v48
  %v53 = vmul.f32 %v49, %v49
  %v54 = vmul.f32 %v50, %v50
  %v55 = vadd.f32 %v51, %v52
  %v56 = vadd.f32 %v55, %v53
  %v57 = vadd.f32 %v56, %v54
  %v58 = vrot.slane %v57, 4
  %v59 = vadd.f32 %v57, %v58
  %v60 = vrot.slane %v59, 2
  %v61 = vadd.f32 %v59, %v60
  %v62 = vrot.slane %v61, 1
  %v63 = vadd.f32 %v61, %v62
  %v64 = vmul.f32 %v63, %v45
  %v65 = vadd.f32 %v64, 1e-05
  %v66 = vrsqrt.pop %v65
  %v67 = vmul.f32 %v47, %v66
  %v68 = vmul.f32 %v48, %v66
  %v69 = vmul.f32 %v49, %v66
  %v70 = vmul.f32 %v50, %v66
  %72 = vset.pattern.permute.xlu0 0
  %73 = vperm.xlu0 %72, %v20
  %v74 = vpop.permute.xlu0 %73
  %77 = vset.pattern.permute.xlu0 0
  %78 = vperm.xlu0 %77, %v21
  %v79 = vpop.permute.xlu0 %78
  %82 = vset.pattern.permute.xlu0 0
  %83 = vperm.xlu0 %82, %v22
  %v84 = vpop.permute.xlu0 %83
  %87 = vset.pattern.permute.xlu0 0
  %88 = vperm.xlu0 %87, %v23
  %v89 = vpop.permute.xlu0 %88
  %v91 = vmul.f32 %v67, %v74
  %v92 = vmul.f32 %v68, %v79
  %v93 = vmul.f32 %v69, %v84
  %v94 = vmul.f32 %v70, %v89
  %95 = vset.pattern.permute.xlu0 1
  %96 = vperm.xlu0 %95, %v20
  %v97 = vpop.permute.xlu0 %96
  %99 = vset.pattern.permute.xlu0 1
  %100 = vperm.xlu0 %99, %v21
  %v101 = vpop.permute.xlu0 %100
  %103 = vset.pattern.permute.xlu0 1
  %104 = vperm.xlu0 %103, %v22
  %v105 = vpop.permute.xlu0 %104
  %107 = vset.pattern.permute.xlu0 1
  %108 = vperm.xlu0 %107, %v23
  %v109 = vpop.permute.xlu0 %108
  %v111 = vadd.f32 %v91, %v97
  %v112 = vadd.f32 %v92, %v101
  %v113 = vadd.f32 %v93, %v105
  %v114 = vadd.f32 %v94, %v109
  %v115 = vld [vmem:[%s2] sm:$0xff]
  %v116 = vld [vmem:[%s2 + $0x8] sm:$0xff]
  %v117 = vld [vmem:[%s2 + $0x10] sm:$0xff]
  %v118 = vld [vmem:[%s2 + $0x18] sm:$0xff]
  %119 = vset.pattern.permute.xlu0 2
  %120 = vperm.xlu0 %119, %v20
  %v121 = vpop.permute.xlu0 %120
  %123 = vset.pattern.permute.xlu0 2
  %124 = vperm.xlu0 %123, %v21
  %v125 = vpop.permute.xlu0 %124
  %127 = vset.pattern.permute.xlu0 2
  %128 = vperm.xlu0 %127, %v22
  %v129 = vpop.permute.xlu0 %128
  %131 = vset.pattern.permute.xlu0 2
  %132 = vperm.xlu0 %131, %v23
  %v133 = vpop.permute.xlu0 %132
  %vm135 = vcmask 261120
  %v137 = vsel %vm135, %v115, 0
  %v140 = vsel %vm135, %v116, 0
  %v143 = vsel %vm135, %v117, 0
  %v146 = vsel %vm135, %v118, 0
  %148 = vmatprep.subr.mxu0 0.0
  %149 = vmatpush1.msra.mxu0 %v111
  %150 = vmatprep.subr.mxu0 0.0
  %151 = vmatpush1.msra.mxu0 %v112
  %152 = vmatprep.subr.mxu0 0.0
  %153 = vmatpush1.msra.mxu0 %v113
  %154 = vmatprep.subr.mxu0 0.0
  %155 = vmatpush1.msra.mxu0 %v114
  %156 = vmatprep.subr.mxu0 0.0
  %157 = vmatpush1.msra.mxu0 0.0
  %158 = vmatprep.subr.mxu0 0.0
  %159 = vmatpush1.msra.mxu0 0.0
  %160 = vmatprep.subr.mxu0 0.0
  %161 = vmatpush1.msra.mxu0 0.0
  %162 = vmatprep.subr.mxu0 0.0
  %163 = vmatpush1.msra.mxu0 0.0
  %164 = vmatprep.subr.mxu0 0.0
  %165 = vmatpush1.msra.mxu0 0.0
  %166 = vmatprep.subr.mxu0 0.0
  %167 = vmatpush1.msra.mxu0 0.0
  %168 = vmatprep.subr.mxu0 0.0
  %169 = vmatpush1.msra.mxu0 0.0
  %170 = vmatprep.subr.mxu0 0.0
  %171 = vmatpush1.msra.mxu0 0.0
  %172 = vmatprep.subr.mxu0 0.0
  %173 = vmatpush1.msra.mxu0 0.0
  %174 = vmatprep.subr.mxu0 0.0
  %175 = vmatpush1.msra.mxu0 0.0
  %176 = vmatprep.subr.mxu0 0.0
  %177 = vmatpush1.msra.mxu0 0.0
  %178 = vmatprep.subr.mxu0 0.0
  %179 = vmatpush1.msra.mxu0 0.0
  %180 = vmatprep.subr.mxu0 0.0
  %181 = vmatpush1.msra.mxu0 0.0
  %182 = vmatprep.subr.mxu0 0.0
  %183 = vmatpush1.msra.mxu0 0.0
  %184 = vmatprep.subr.mxu0 0.0
  %185 = vmatpush1.msra.mxu0 0.0
  %186 = vmatprep.subr.mxu0 0.0
  %187 = vmatpush1.msra.mxu0 0.0
  %188 = vmatprep.subr.mxu0 0.0
  %189 = vmatpush1.msra.mxu0 0.0
  %190 = vmatprep.subr.mxu0 0.0
  %191 = vmatpush1.msra.mxu0 0.0
  %192 = vmatprep.subr.mxu0 0.0
  %193 = vmatpush1.msra.mxu0 0.0
  %194 = vmatprep.subr.mxu0 0.0
  %195 = vmatpush1.msra.mxu0 0.0
  %196 = vmatprep.subr.mxu0 0.0
  %197 = vmatpush1.msra.mxu0 0.0
  %198 = vmatprep.subr.mxu0 0.0
  %199 = vmatpush1.msra.mxu0 0.0
  %200 = vmatprep.subr.mxu0 0.0
  %201 = vmatpush1.msra.mxu0 0.0
  %202 = vmatprep.subr.mxu0 0.0
  %203 = vmatpush1.msra.mxu0 0.0
  %204 = vmatprep.subr.mxu0 0.0
  %205 = vmatpush1.msra.mxu0 0.0
  %206 = vmatprep.subr.mxu0 0.0
  %207 = vmatpush1.msra.mxu0 0.0
  %208 = vmatprep.subr.mxu0 0.0
  %209 = vmatpush1.msra.mxu0 0.0
  %210 = vmatprep.subr.mxu0 0.0
  %211 = vmatpush1.msra.mxu0 0.0
  %212 = vmatprep.mubr.f32.mxu0 0.0
  %213 = vmatmul.mubr.f32.gmra.mrb[0].mxu0 %v137
  %v214 = vpop.f32.mrb[0].mxu0
  %v215 = vadd.f32 %v121, %v214
  %v216 = vpop.f32.mrb[0].mxu0
  %217 = vmatprep.mubr.f32.mxu0 0.0
  %218 = vmatmul.mubr.f32.gmra.mrb[0].mxu0 %v140
  %v219 = vpop.f32.mrb[0].mxu0
  %v220 = vadd.f32 %v125, %v219
  %v221 = vpop.f32.mrb[0].mxu0
  %222 = vmatprep.mubr.f32.mxu0 0.0
  %223 = vmatmul.mubr.f32.gmra.mrb[0].mxu0 %v143
  %v224 = vpop.f32.mrb[0].mxu0
  %v225 = vadd.f32 %v129, %v224
  %v226 = vpop.f32.mrb[0].mxu0
  %227 = vmatprep.mubr.f32.mxu0 0.0
  %228 = vmatmul.mubr.f32.gmra.mrb[0].mxu0 %v146
  %v229 = vpop.f32.mrb[0].mxu0
  %v230 = vadd.f32 %v133, %v229
  %v231 = vpop.f32.mrb[0].mxu0
  %232 = vdwg.mxu0
  %v233 = vmul.f32 %v215, 0.5
  %v234 = vmul.f32 %v220, 0.5
  %v235 = vmul.f32 %v225, 0.5
  %v236 = vmul.f32 %v230, 0.5
  %v237 = vmul.f32 %v215, 0.70710677
  %v238 = vmul.f32 %v220, 0.70710677
  %v239 = vmul.f32 %v225, 0.70710677
  %v240 = vmul.f32 %v230, 0.70710677
  %v241 = verf.f32.pop %v237
  %v242 = verf.f32.pop %v238
  %v243 = verf.f32.pop %v239
  %v244 = verf.f32.pop %v240
  %v245 = vadd.f32 %v241, 1.0
  %v246 = vadd.f32 %v242, 1.0
  %v247 = vadd.f32 %v243, 1.0
  %v248 = vadd.f32 %v244, 1.0
  %v249 = vmul.f32 %v233, %v245
  %v250 = vmul.f32 %v234, %v246
  %v251 = vmul.f32 %v235, %v247
  %v252 = vmul.f32 %v236, %v248
  %s253 = scalar_lea.vmem %s2, 32
  %v254 = vld [vmem:[%s253] sm:$0xff]
  %v255 = vld [vmem:[%s253 + $0x8] sm:$0xff]
  %v256 = vld [vmem:[%s253 + $0x10] sm:$0xff]
  %v257 = vld [vmem:[%s253 + $0x18] sm:$0xff]
  %v259 = vsel %vm135, %v254, 0
  %v262 = vsel %vm135, %v255, 0
  %v265 = vsel %vm135, %v256, 0
  %v268 = vsel %vm135, %v257, 0
  %270 = vmatprep.subr.mxu0 0.0
  %271 = vmatpush1.msra.mxu0 %v249
  %272 = vmatprep.subr.mxu0 0.0
  %273 = vmatpush1.msra.mxu0 %v250
  %274 = vmatprep.subr.mxu0 0.0
  %275 = vmatpush1.msra.mxu0 %v251
  %276 = vmatprep.subr.mxu0 0.0
  %277 = vmatpush1.msra.mxu0 %v252
  %278 = vmatprep.subr.mxu0 0.0
  %279 = vmatpush1.msra.mxu0 0.0
  %280 = vmatprep.subr.mxu0 0.0
  %281 = vmatpush1.msra.mxu0 0.0
  %282 = vmatprep.subr.mxu0 0.0
  %283 = vmatpush1.msra.mxu0 0.0
  %284 = vmatprep.subr.mxu0 0.0
  %285 = vmatpush1.msra.mxu0 0.0
  %286 = vmatprep.subr.mxu0 0.0
  %287 = vmatpush1.msra.mxu0 0.0
  %288 = vmatprep.subr.mxu0 0.0
  %289 = vmatpush1.msra.mxu0 0.0
  %290 = vmatprep.subr.mxu0 0.0
  %291 = vmatpush1.msra.mxu0 0.0
  %292 = vmatprep.subr.mxu0 0.0
  %293 = vmatpush1.msra.mxu0 0.0
  %294 = vmatprep.subr.mxu0 0.0
  %295 = vmatpush1.msra.mxu0 0.0
  %296 = vmatprep.subr.mxu0 0.0
  %297 = vmatpush1.msra.mxu0 0.0
  %298 = vmatprep.subr.mxu0 0.0
  %299 = vmatpush1.msra.mxu0 0.0
  %300 = vmatprep.subr.mxu0 0.0
  %301 = vmatpush1.msra.mxu0 0.0
  %302 = vmatprep.subr.mxu0 0.0
  %303 = vmatpush1.msra.mxu0 0.0
  %304 = vmatprep.subr.mxu0 0.0
  %305 = vmatpush1.msra.mxu0 0.0
  %306 = vmatprep.subr.mxu0 0.0
  %307 = vmatpush1.msra.mxu0 0.0
  %308 = vmatprep.subr.mxu0 0.0
  %309 = vmatpush1.msra.mxu0 0.0
  %310 = vmatprep.subr.mxu0 0.0
  %311 = vmatpush1.msra.mxu0 0.0
  %312 = vmatprep.subr.mxu0 0.0
  %313 = vmatpush1.msra.mxu0 0.0
  %314 = vmatprep.subr.mxu0 0.0
  %315 = vmatpush1.msra.mxu0 0.0
  %316 = vmatprep.subr.mxu0 0.0
  %317 = vmatpush1.msra.mxu0 0.0
  %318 = vmatprep.subr.mxu0 0.0
  %319 = vmatpush1.msra.mxu0 0.0
  %320 = vmatprep.subr.mxu0 0.0
  %321 = vmatpush1.msra.mxu0 0.0
  %322 = vmatprep.subr.mxu0 0.0
  %323 = vmatpush1.msra.mxu0 0.0
  %324 = vmatprep.subr.mxu0 0.0
  %325 = vmatpush1.msra.mxu0 0.0
  %326 = vmatprep.subr.mxu0 0.0
  %327 = vmatpush1.msra.mxu0 0.0
  %328 = vmatprep.subr.mxu0 0.0
  %329 = vmatpush1.msra.mxu0 0.0
  %330 = vmatprep.subr.mxu0 0.0
  %331 = vmatpush1.msra.mxu0 0.0
  %332 = vmatprep.subr.mxu0 0.0
  %333 = vmatpush1.msra.mxu0 0.0
  %334 = vmatprep.mubr.f32.mxu0 0.0
  %335 = vmatmul.mubr.f32.gmra.mrb[0].mxu0 %v259
  %v336 = vpop.f32.mrb[0].mxu0
  %v337 = vadd.f32 0.0, %v336
  %v338 = vpop.f32.mrb[0].mxu0
  %339 = vmatprep.mubr.f32.mxu0 0.0
  %340 = vmatmul.mubr.f32.gmra.mrb[0].mxu0 %v262
  %v341 = vpop.f32.mrb[0].mxu0
  %v342 = vadd.f32 0.0, %v341
  %v343 = vpop.f32.mrb[0].mxu0
  %344 = vmatprep.mubr.f32.mxu0 0.0
  %345 = vmatmul.mubr.f32.gmra.mrb[0].mxu0 %v265
  %v346 = vpop.f32.mrb[0].mxu0
  %v347 = vadd.f32 0.0, %v346
  %v348 = vpop.f32.mrb[0].mxu0
  %349 = vmatprep.mubr.f32.mxu0 0.0
  %350 = vmatmul.mubr.f32.gmra.mrb[0].mxu0 %v268
  %v351 = vpop.f32.mrb[0].mxu0
  %v352 = vadd.f32 0.0, %v351
  %v353 = vpop.f32.mrb[0].mxu0
  %354 = vdwg.mxu0
  %v355 = vadd.f32 %v32, %v337
  %v356 = vadd.f32 %v33, %v342
  %v357 = vadd.f32 %v34, %v347
  %v358 = vadd.f32 %v35, %v352
  %359 = vset.pattern.permute.xlu0 3
  %360 = vperm.xlu0 %359, %v20
  %v361 = vpop.permute.xlu0 %360
  %363 = vset.pattern.permute.xlu0 3
  %364 = vperm.xlu0 %363, %v21
  %v365 = vpop.permute.xlu0 %364
  %367 = vset.pattern.permute.xlu0 3
  %368 = vperm.xlu0 %367, %v22
  %v369 = vpop.permute.xlu0 %368
  %371 = vset.pattern.permute.xlu0 3
  %372 = vperm.xlu0 %371, %v23
  %v373 = vpop.permute.xlu0 %372
  %v375 = vadd.f32 %v355, %v361
  %v376 = vadd.f32 %v356, %v365
  %v377 = vadd.f32 %v357, %v369
  %v378 = vadd.f32 %v358, %v373
  %v379 = vadd.f32 %v375, %v376
  %v380 = vadd.f32 %v379, %v377
  %v381 = vadd.f32 %v380, %v378
  %v382 = vrot.slane %v381, 4
  %v383 = vadd.f32 %v381, %v382
  %v384 = vrot.slane %v383, 2
  %v385 = vadd.f32 %v383, %v384
  %v386 = vrot.slane %v385, 1
  %v387 = vadd.f32 %v385, %v386
  %v388 = vmul.f32 %v387, %v45
  %v389 = vsub.f32 %v375, %v388
  %v390 = vsub.f32 %v376, %v388
  %v391 = vsub.f32 %v377, %v388
  %v392 = vsub.f32 %v378, %v388
  %v393 = vmul.f32 %v389, %v389
  %v394 = vmul.f32 %v390, %v390
  %v395 = vmul.f32 %v391, %v391
  %v396 = vmul.f32 %v392, %v392
  %v397 = vadd.f32 %v393, %v394
  %v398 = vadd.f32 %v397, %v395
  %v399 = vadd.f32 %v398, %v396
  %v400 = vrot.slane %v399, 4
  %v401 = vadd.f32 %v399, %v400
  %v402 = vrot.slane %v401, 2
  %v403 = vadd.f32 %v401, %v402
  %v404 = vrot.slane %v403, 1
  %v405 = vadd.f32 %v403, %v404
  %v406 = vmul.f32 %v405, %v45
  %v407 = vadd.f32 %v406, 1e-05
  %v408 = vrsqrt.pop %v407
  %v409 = vmul.f32 %v389, %v408
  %v410 = vmul.f32 %v390, %v408
  %v411 = vmul.f32 %v391, %v408
  %v412 = vmul.f32 %v392, %v408
  %413 = vset.pattern.permute.xlu0 4
  %414 = vperm.xlu0 %413, %v20
  %v415 = vpop.permute.xlu0 %414
  %417 = vset.pattern.permute.xlu0 4
  %418 = vperm.xlu0 %417, %v21
  %v419 = vpop.permute.xlu0 %418
  %421 = vset.pattern.permute.xlu0 4
  %422 = vperm.xlu0 %421, %v22
  %v423 = vpop.permute.xlu0 %422
  %425 = vset.pattern.permute.xlu0 4
  %426 = vperm.xlu0 %425, %v23
  %v427 = vpop.permute.xlu0 %426
  %v429 = vmul.f32 %v409, %v415
  %v430 = vmul.f32 %v410, %v419
  %v431 = vmul.f32 %v411, %v423
  %v432 = vmul.f32 %v412, %v427
  %433 = vset.pattern.permute.xlu0 5
  %434 = vperm.xlu0 %433, %v20
  %v435 = vpop.permute.xlu0 %434
  %437 = vset.pattern.permute.xlu0 5
  %438 = vperm.xlu0 %437, %v21
  %v439 = vpop.permute.xlu0 %438
  %441 = vset.pattern.permute.xlu0 5
  %442 = vperm.xlu0 %441, %v22
  %v443 = vpop.permute.xlu0 %442
  %445 = vset.pattern.permute.xlu0 5
  %446 = vperm.xlu0 %445, %v23
  %v447 = vpop.permute.xlu0 %446
  %v449 = vadd.f32 %v429, %v435
  %v450 = vadd.f32 %v430, %v439
  %v451 = vadd.f32 %v431, %v443
  %v452 = vadd.f32 %v432, %v447
  %s453 = scalar_lea.vmem %s2, 64
  %v454 = vld [vmem:[%s453] sm:$0xff]
  %v455 = vld [vmem:[%s453 + $0x8] sm:$0xff]
  %v456 = vld [vmem:[%s453 + $0x10] sm:$0xff]
  %v457 = vld [vmem:[%s453 + $0x18] sm:$0xff]
  %458 = vset.pattern.permute.xlu0 6
  %459 = vperm.xlu0 %458, %v20
  %v460 = vpop.permute.xlu0 %459
  %462 = vset.pattern.permute.xlu0 6
  %463 = vperm.xlu0 %462, %v21
  %v464 = vpop.permute.xlu0 %463
  %466 = vset.pattern.permute.xlu0 6
  %467 = vperm.xlu0 %466, %v22
  %v468 = vpop.permute.xlu0 %467
  %470 = vset.pattern.permute.xlu0 6
  %471 = vperm.xlu0 %470, %v23
  %v472 = vpop.permute.xlu0 %471
  %v475 = vsel %vm135, %v454, 0
  %v478 = vsel %vm135, %v455, 0
  %v481 = vsel %vm135, %v456, 0
  %v484 = vsel %vm135, %v457, 0
  %486 = vmatprep.subr.mxu0 0.0
  %487 = vmatpush1.msra.mxu0 %v449
  %488 = vmatprep.subr.mxu0 0.0
  %489 = vmatpush1.msra.mxu0 %v450
  %490 = vmatprep.subr.mxu0 0.0
  %491 = vmatpush1.msra.mxu0 %v451
  %492 = vmatprep.subr.mxu0 0.0
  %493 = vmatpush1.msra.mxu0 %v452
  %494 = vmatprep.subr.mxu0 0.0
  %495 = vmatpush1.msra.mxu0 0.0
  %496 = vmatprep.subr.mxu0 0.0
  %497 = vmatpush1.msra.mxu0 0.0
  %498 = vmatprep.subr.mxu0 0.0
  %499 = vmatpush1.msra.mxu0 0.0
  %500 = vmatprep.subr.mxu0 0.0
  %501 = vmatpush1.msra.mxu0 0.0
  %502 = vmatprep.subr.mxu0 0.0
  %503 = vmatpush1.msra.mxu0 0.0
  %504 = vmatprep.subr.mxu0 0.0
  %505 = vmatpush1.msra.mxu0 0.0
  %506 = vmatprep.subr.mxu0 0.0
  %507 = vmatpush1.msra.mxu0 0.0
  %508 = vmatprep.subr.mxu0 0.0
  %509 = vmatpush1.msra.mxu0 0.0
  %510 = vmatprep.subr.mxu0 0.0
  %511 = vmatpush1.msra.mxu0 0.0
  %512 = vmatprep.subr.mxu0 0.0
  %513 = vmatpush1.msra.mxu0 0.0
  %514 = vmatprep.subr.mxu0 0.0
  %515 = vmatpush1.msra.mxu0 0.0
  %516 = vmatprep.subr.mxu0 0.0
  %517 = vmatpush1.msra.mxu0 0.0
  %518 = vmatprep.subr.mxu0 0.0
  %519 = vmatpush1.msra.mxu0 0.0
  %520 = vmatprep.subr.mxu0 0.0
  %521 = vmatpush1.msra.mxu0 0.0
  %522 = vmatprep.subr.mxu0 0.0
  %523 = vmatpush1.msra.mxu0 0.0
  %524 = vmatprep.subr.mxu0 0.0
  %525 = vmatpush1.msra.mxu0 0.0
  %526 = vmatprep.subr.mxu0 0.0
  %527 = vmatpush1.msra.mxu0 0.0
  %528 = vmatprep.subr.mxu0 0.0
  %529 = vmatpush1.msra.mxu0 0.0
  %530 = vmatprep.subr.mxu0 0.0
  %531 = vmatpush1.msra.mxu0 0.0
  %532 = vmatprep.subr.mxu0 0.0
  %533 = vmatpush1.msra.mxu0 0.0
  %534 = vmatprep.subr.mxu0 0.0
  %535 = vmatpush1.msra.mxu0 0.0
  %536 = vmatprep.subr.mxu0 0.0
  %537 = vmatpush1.msra.mxu0 0.0
  %538 = vmatprep.subr.mxu0 0.0
  %539 = vmatpush1.msra.mxu0 0.0
  %540 = vmatprep.subr.mxu0 0.0
  %541 = vmatpush1.msra.mxu0 0.0
  %542 = vmatprep.subr.mxu0 0.0
  %543 = vmatpush1.msra.mxu0 0.0
  %544 = vmatprep.subr.mxu0 0.0
  %545 = vmatpush1.msra.mxu0 0.0
  %546 = vmatprep.subr.mxu0 0.0
  %547 = vmatpush1.msra.mxu0 0.0
  %548 = vmatprep.subr.mxu0 0.0
  %549 = vmatpush1.msra.mxu0 0.0
  %550 = vmatprep.mubr.f32.mxu0 0.0
  %551 = vmatmul.mubr.f32.gmra.mrb[0].mxu0 %v475
  %v552 = vpop.f32.mrb[0].mxu0
  %v553 = vadd.f32 %v460, %v552
  %v554 = vpop.f32.mrb[0].mxu0
  %555 = vmatprep.mubr.f32.mxu0 0.0
  %556 = vmatmul.mubr.f32.gmra.mrb[0].mxu0 %v478
  %v557 = vpop.f32.mrb[0].mxu0
  %v558 = vadd.f32 %v464, %v557
  %v559 = vpop.f32.mrb[0].mxu0
  %560 = vmatprep.mubr.f32.mxu0 0.0
  %561 = vmatmul.mubr.f32.gmra.mrb[0].mxu0 %v481
  %v562 = vpop.f32.mrb[0].mxu0
  %v563 = vadd.f32 %v468, %v562
  %v564 = vpop.f32.mrb[0].mxu0
  %565 = vmatprep.mubr.f32.mxu0 0.0
  %566 = vmatmul.mubr.f32.gmra.mrb[0].mxu0 %v484
  %v567 = vpop.f32.mrb[0].mxu0
  %v568 = vadd.f32 %v472, %v567
  %v569 = vpop.f32.mrb[0].mxu0
  %570 = vdwg.mxu0
  %v571 = vmul.f32 %v553, 0.5
  %v572 = vmul.f32 %v558, 0.5
  %v573 = vmul.f32 %v563, 0.5
  %v574 = vmul.f32 %v568, 0.5
  %v575 = vmul.f32 %v553, 0.70710677
  %v576 = vmul.f32 %v558, 0.70710677
  %v577 = vmul.f32 %v563, 0.70710677
  %v578 = vmul.f32 %v568, 0.70710677
  %v579 = verf.f32.pop %v575
  %v580 = verf.f32.pop %v576
  %v581 = verf.f32.pop %v577
  %v582 = verf.f32.pop %v578
  %v583 = vadd.f32 %v579, 1.0
  %v584 = vadd.f32 %v580, 1.0
  %v585 = vadd.f32 %v581, 1.0
  %v586 = vadd.f32 %v582, 1.0
  %v587 = vmul.f32 %v571, %v583
  %v588 = vmul.f32 %v572, %v584
  %v589 = vmul.f32 %v573, %v585
  %v590 = vmul.f32 %v574, %v586
  %s591 = scalar_lea.vmem %s2, 96
  %v592 = vld [vmem:[%s591] sm:$0xff]
  %v593 = vld [vmem:[%s591 + $0x8] sm:$0xff]
  %v594 = vld [vmem:[%s591 + $0x10] sm:$0xff]
  %v595 = vld [vmem:[%s591 + $0x18] sm:$0xff]
  %v597 = vsel %vm135, %v592, 0
  %v600 = vsel %vm135, %v593, 0
  %v603 = vsel %vm135, %v594, 0
  %v606 = vsel %vm135, %v595, 0
  %608 = vmatprep.subr.mxu0 0.0
  %609 = vmatpush1.msra.mxu0 %v587
  %610 = vmatprep.subr.mxu0 0.0
  %611 = vmatpush1.msra.mxu0 %v588
  %612 = vmatprep.subr.mxu0 0.0
  %613 = vmatpush1.msra.mxu0 %v589
  %614 = vmatprep.subr.mxu0 0.0
  %615 = vmatpush1.msra.mxu0 %v590
  %616 = vmatprep.subr.mxu0 0.0
  %617 = vmatpush1.msra.mxu0 0.0
  %618 = vmatprep.subr.mxu0 0.0
  %619 = vmatpush1.msra.mxu0 0.0
  %620 = vmatprep.subr.mxu0 0.0
  %621 = vmatpush1.msra.mxu0 0.0
  %622 = vmatprep.subr.mxu0 0.0
  %623 = vmatpush1.msra.mxu0 0.0
  %624 = vmatprep.subr.mxu0 0.0
  %625 = vmatpush1.msra.mxu0 0.0
  %626 = vmatprep.subr.mxu0 0.0
  %627 = vmatpush1.msra.mxu0 0.0
  %628 = vmatprep.subr.mxu0 0.0
  %629 = vmatpush1.msra.mxu0 0.0
  %630 = vmatprep.subr.mxu0 0.0
  %631 = vmatpush1.msra.mxu0 0.0
  %632 = vmatprep.subr.mxu0 0.0
  %633 = vmatpush1.msra.mxu0 0.0
  %634 = vmatprep.subr.mxu0 0.0
  %635 = vmatpush1.msra.mxu0 0.0
  %636 = vmatprep.subr.mxu0 0.0
  %637 = vmatpush1.msra.mxu0 0.0
  %638 = vmatprep.subr.mxu0 0.0
  %639 = vmatpush1.msra.mxu0 0.0
  %640 = vmatprep.subr.mxu0 0.0
  %641 = vmatpush1.msra.mxu0 0.0
  %642 = vmatprep.subr.mxu0 0.0
  %643 = vmatpush1.msra.mxu0 0.0
  %644 = vmatprep.subr.mxu0 0.0
  %645 = vmatpush1.msra.mxu0 0.0
  %646 = vmatprep.subr.mxu0 0.0
  %647 = vmatpush1.msra.mxu0 0.0
  %648 = vmatprep.subr.mxu0 0.0
  %649 = vmatpush1.msra.mxu0 0.0
  %650 = vmatprep.subr.mxu0 0.0
  %651 = vmatpush1.msra.mxu0 0.0
  %652 = vmatprep.subr.mxu0 0.0
  %653 = vmatpush1.msra.mxu0 0.0
  %654 = vmatprep.subr.mxu0 0.0
  %655 = vmatpush1.msra.mxu0 0.0
  %656 = vmatprep.subr.mxu0 0.0
  %657 = vmatpush1.msra.mxu0 0.0
  %658 = vmatprep.subr.mxu0 0.0
  %659 = vmatpush1.msra.mxu0 0.0
  %660 = vmatprep.subr.mxu0 0.0
  %661 = vmatpush1.msra.mxu0 0.0
  %662 = vmatprep.subr.mxu0 0.0
  %663 = vmatpush1.msra.mxu0 0.0
  %664 = vmatprep.subr.mxu0 0.0
  %665 = vmatpush1.msra.mxu0 0.0
  %666 = vmatprep.subr.mxu0 0.0
  %667 = vmatpush1.msra.mxu0 0.0
  %668 = vmatprep.subr.mxu0 0.0
  %669 = vmatpush1.msra.mxu0 0.0
  %670 = vmatprep.subr.mxu0 0.0
  %671 = vmatpush1.msra.mxu0 0.0
  %672 = vmatprep.mubr.f32.mxu0 0.0
  %673 = vmatmul.mubr.f32.gmra.mrb[0].mxu0 %v597
  %v674 = vpop.f32.mrb[0].mxu0
  %v675 = vadd.f32 0.0, %v674
  %v676 = vpop.f32.mrb[0].mxu0
  %677 = vmatprep.mubr.f32.mxu0 0.0
  %678 = vmatmul.mubr.f32.gmra.mrb[0].mxu0 %v600
  %v679 = vpop.f32.mrb[0].mxu0
  %v680 = vadd.f32 0.0, %v679
  %v681 = vpop.f32.mrb[0].mxu0
  %682 = vmatprep.mubr.f32.mxu0 0.0
  %683 = vmatmul.mubr.f32.gmra.mrb[0].mxu0 %v603
  %v684 = vpop.f32.mrb[0].mxu0
  %v685 = vadd.f32 0.0, %v684
  %v686 = vpop.f32.mrb[0].mxu0
  %687 = vmatprep.mubr.f32.mxu0 0.0
  %688 = vmatmul.mubr.f32.gmra.mrb[0].mxu0 %v606
  %v689 = vpop.f32.mrb[0].mxu0
  %v690 = vadd.f32 0.0, %v689
  %v691 = vpop.f32.mrb[0].mxu0
  %692 = vdwg.mxu0
  %v693 = vadd.f32 %v375, %v675
  %v694 = vadd.f32 %v376, %v680
  %v695 = vadd.f32 %v377, %v685
  %v696 = vadd.f32 %v378, %v690
  %697 = vset.pattern.permute.xlu0 7
  %698 = vperm.xlu0 %697, %v20
  %v699 = vpop.permute.xlu0 %698
  %701 = vset.pattern.permute.xlu0 7
  %702 = vperm.xlu0 %701, %v21
  %v703 = vpop.permute.xlu0 %702
  %705 = vset.pattern.permute.xlu0 7
  %706 = vperm.xlu0 %705, %v22
  %v707 = vpop.permute.xlu0 %706
  %709 = vset.pattern.permute.xlu0 7
  %710 = vperm.xlu0 %709, %v23
  %v711 = vpop.permute.xlu0 %710
  %v713 = vadd.f32 %v693, %v699
  %v714 = vadd.f32 %v694, %v703
  %v715 = vadd.f32 %v695, %v707
  %v716 = vadd.f32 %v696, %v711
  %v717 = vadd.f32 %v713, %v714
  %v718 = vadd.f32 %v717, %v715
  %v719 = vadd.f32 %v718, %v716
  %v720 = vrot.slane %v719, 4
  %v721 = vadd.f32 %v719, %v720
  %v722 = vrot.slane %v721, 2
  %v723 = vadd.f32 %v721, %v722
  %v724 = vrot.slane %v723, 1
  %v725 = vadd.f32 %v723, %v724
  %v726 = vmul.f32 %v725, %v45
  %v727 = vsub.f32 %v713, %v726
  %v728 = vsub.f32 %v714, %v726
  %v729 = vsub.f32 %v715, %v726
  %v730 = vsub.f32 %v716, %v726
  %v731 = vmul.f32 %v727, %v727
  %v732 = vmul.f32 %v728, %v728
  %v733 = vmul.f32 %v729, %v729
  %v734 = vmul.f32 %v730, %v730
  %v735 = vadd.f32 %v731, %v732
  %v736 = vadd.f32 %v735, %v733
  %v737 = vadd.f32 %v736, %v734
  %v738 = vrot.slane %v737, 4
  %v739 = vadd.f32 %v737, %v738
  %v740 = vrot.slane %v739, 2
  %v741 = vadd.f32 %v739, %v740
  %v742 = vrot.slane %v741, 1
  %v743 = vadd.f32 %v741, %v742
  %v744 = vmul.f32 %v743, %v45
  %v745 = vadd.f32 %v744, 1e-05
  %v746 = vrsqrt.pop %v745
  %v747 = vmul.f32 %v727, %v746
  %v748 = vmul.f32 %v728, %v746
  %v749 = vmul.f32 %v729, %v746
  %v750 = vmul.f32 %v730, %v746
  %751 = vset.pattern.permute.xlu0 8
  %752 = vperm.xlu0 %751, %v20
  %v753 = vpop.permute.xlu0 %752
  %755 = vset.pattern.permute.xlu0 8
  %756 = vperm.xlu0 %755, %v21
  %v757 = vpop.permute.xlu0 %756
  %759 = vset.pattern.permute.xlu0 8
  %760 = vperm.xlu0 %759, %v22
  %v761 = vpop.permute.xlu0 %760
  %763 = vset.pattern.permute.xlu0 8
  %764 = vperm.xlu0 %763, %v23
  %v765 = vpop.permute.xlu0 %764
  %v767 = vmul.f32 %v747, %v753
  %v768 = vmul.f32 %v748, %v757
  %v769 = vmul.f32 %v749, %v761
  %v770 = vmul.f32 %v750, %v765
  %771 = vset.pattern.permute.xlu0 9
  %772 = vperm.xlu0 %771, %v20
  %v773 = vpop.permute.xlu0 %772
  %775 = vset.pattern.permute.xlu0 9
  %776 = vperm.xlu0 %775, %v21
  %v777 = vpop.permute.xlu0 %776
  %779 = vset.pattern.permute.xlu0 9
  %780 = vperm.xlu0 %779, %v22
  %v781 = vpop.permute.xlu0 %780
  %783 = vset.pattern.permute.xlu0 9
  %784 = vperm.xlu0 %783, %v23
  %v785 = vpop.permute.xlu0 %784
  %v787 = vadd.f32 %v767, %v773
  %v788 = vadd.f32 %v768, %v777
  %v789 = vadd.f32 %v769, %v781
  %v790 = vadd.f32 %v770, %v785
  %s791 = scalar_lea.vmem %s2, 128
  %v792 = vld [vmem:[%s791] sm:$0xff]
  %v793 = vld [vmem:[%s791 + $0x8] sm:$0xff]
  %v794 = vld [vmem:[%s791 + $0x10] sm:$0xff]
  %v795 = vld [vmem:[%s791 + $0x18] sm:$0xff]
  %796 = vset.pattern.permute.xlu0 10
  %797 = vperm.xlu0 %796, %v20
  %v798 = vpop.permute.xlu0 %797
  %800 = vset.pattern.permute.xlu0 10
  %801 = vperm.xlu0 %800, %v21
  %v802 = vpop.permute.xlu0 %801
  %804 = vset.pattern.permute.xlu0 10
  %805 = vperm.xlu0 %804, %v22
  %v806 = vpop.permute.xlu0 %805
  %808 = vset.pattern.permute.xlu0 10
  %809 = vperm.xlu0 %808, %v23
  %v810 = vpop.permute.xlu0 %809
  %v813 = vsel %vm135, %v792, 0
  %v816 = vsel %vm135, %v793, 0
  %v819 = vsel %vm135, %v794, 0
  %v822 = vsel %vm135, %v795, 0
  %824 = vmatprep.subr.mxu0 0.0
  %825 = vmatpush1.msra.mxu0 %v787
  %826 = vmatprep.subr.mxu0 0.0
  %827 = vmatpush1.msra.mxu0 %v788
  %828 = vmatprep.subr.mxu0 0.0
  %829 = vmatpush1.msra.mxu0 %v789
  %830 = vmatprep.subr.mxu0 0.0
  %831 = vmatpush1.msra.mxu0 %v790
  %832 = vmatprep.subr.mxu0 0.0
  %833 = vmatpush1.msra.mxu0 0.0
  %834 = vmatprep.subr.mxu0 0.0
  %835 = vmatpush1.msra.mxu0 0.0
  %836 = vmatprep.subr.mxu0 0.0
  %837 = vmatpush1.msra.mxu0 0.0
  %838 = vmatprep.subr.mxu0 0.0
  %839 = vmatpush1.msra.mxu0 0.0
  %840 = vmatprep.subr.mxu0 0.0
  %841 = vmatpush1.msra.mxu0 0.0
  %842 = vmatprep.subr.mxu0 0.0
  %843 = vmatpush1.msra.mxu0 0.0
  %844 = vmatprep.subr.mxu0 0.0
  %845 = vmatpush1.msra.mxu0 0.0
  %846 = vmatprep.subr.mxu0 0.0
  %847 = vmatpush1.msra.mxu0 0.0
  %848 = vmatprep.subr.mxu0 0.0
  %849 = vmatpush1.msra.mxu0 0.0
  %850 = vmatprep.subr.mxu0 0.0
  %851 = vmatpush1.msra.mxu0 0.0
  %852 = vmatprep.subr.mxu0 0.0
  %853 = vmatpush1.msra.mxu0 0.0
  %854 = vmatprep.subr.mxu0 0.0
  %855 = vmatpush1.msra.mxu0 0.0
  %856 = vmatprep.subr.mxu0 0.0
  %857 = vmatpush1.msra.mxu0 0.0
  %858 = vmatprep.subr.mxu0 0.0
  %859 = vmatpush1.msra.mxu0 0.0
  %860 = vmatprep.subr.mxu0 0.0
  %861 = vmatpush1.msra.mxu0 0.0
  %862 = vmatprep.subr.mxu0 0.0
  %863 = vmatpush1.msra.mxu0 0.0
  %864 = vmatprep.subr.mxu0 0.0
  %865 = vmatpush1.msra.mxu0 0.0
  %866 = vmatprep.subr.mxu0 0.0
  %867 = vmatpush1.msra.mxu0 0.0
  %868 = vmatprep.subr.mxu0 0.0
  %869 = vmatpush1.msra.mxu0 0.0
  %870 = vmatprep.subr.mxu0 0.0
  %871 = vmatpush1.msra.mxu0 0.0
  %872 = vmatprep.subr.mxu0 0.0
  %873 = vmatpush1.msra.mxu0 0.0
  %874 = vmatprep.subr.mxu0 0.0
  %875 = vmatpush1.msra.mxu0 0.0
  %876 = vmatprep.subr.mxu0 0.0
  %877 = vmatpush1.msra.mxu0 0.0
  %878 = vmatprep.subr.mxu0 0.0
  %879 = vmatpush1.msra.mxu0 0.0
  %880 = vmatprep.subr.mxu0 0.0
  %881 = vmatpush1.msra.mxu0 0.0
  %882 = vmatprep.subr.mxu0 0.0
  %883 = vmatpush1.msra.mxu0 0.0
  %884 = vmatprep.subr.mxu0 0.0
  %885 = vmatpush1.msra.mxu0 0.0
  %886 = vmatprep.subr.mxu0 0.0
  %887 = vmatpush1.msra.mxu0 0.0
  %888 = vmatprep.mubr.f32.mxu0 0.0
  %889 = vmatmul.mubr.f32.gmra.mrb[0].mxu0 %v813
  %v890 = vpop.f32.mrb[0].mxu0
  %v891 = vadd.f32 %v798, %v890
  %v892 = vpop.f32.mrb[0].mxu0
  %893 = vmatprep.mubr.f32.mxu0 0.0
  %894 = vmatmul.mubr.f32.gmra.mrb[0].mxu0 %v816
  %v895 = vpop.f32.mrb[0].mxu0
  %v896 = vadd.f32 %v802, %v895
  %v897 = vpop.f32.mrb[0].mxu0
  %898 = vmatprep.mubr.f32.mxu0 0.0
  %899 = vmatmul.mubr.f32.gmra.mrb[0].mxu0 %v819
  %v900 = vpop.f32.mrb[0].mxu0
  %v901 = vadd.f32 %v806, %v900
  %v902 = vpop.f32.mrb[0].mxu0
  %903 = vmatprep.mubr.f32.mxu0 0.0
  %904 = vmatmul.mubr.f32.gmra.mrb[0].mxu0 %v822
  %v905 = vpop.f32.mrb[0].mxu0
  %v906 = vadd.f32 %v810, %v905
  %v907 = vpop.f32.mrb[0].mxu0
  %908 = vdwg.mxu0
  %v909 = vmul.f32 %v891, 0.5
  %v910 = vmul.f32 %v896, 0.5
  %v911 = vmul.f32 %v901, 0.5
  %v912 = vmul.f32 %v906, 0.5
  %v913 = vmul.f32 %v891, 0.70710677
  %v914 = vmul.f32 %v896, 0.70710677
  %v915 = vmul.f32 %v901, 0.70710677
  %v916 = vmul.f32 %v906, 0.70710677
  %v917 = verf.f32.pop %v913
  %v918 = verf.f32.pop %v914
  %v919 = verf.f32.pop %v915
  %v920 = verf.f32.pop %v916
  %v921 = vadd.f32 %v917, 1.0
  %v922 = vadd.f32 %v918, 1.0
  %v923 = vadd.f32 %v919, 1.0
  %v924 = vadd.f32 %v920, 1.0
  %v925 = vmul.f32 %v909, %v921
  %v926 = vmul.f32 %v910, %v922
  %v927 = vmul.f32 %v911, %v923
  %v928 = vmul.f32 %v912, %v924
  %s929 = scalar_lea.vmem %s2, 160
  %v930 = vld [vmem:[%s929] sm:$0xff]
  %v931 = vld [vmem:[%s929 + $0x8] sm:$0xff]
  %v932 = vld [vmem:[%s929 + $0x10] sm:$0xff]
  %v933 = vld [vmem:[%s929 + $0x18] sm:$0xff]
  %v935 = vsel %vm135, %v930, 0
  %v938 = vsel %vm135, %v931, 0
  %v941 = vsel %vm135, %v932, 0
  %v944 = vsel %vm135, %v933, 0
  %946 = vmatprep.subr.mxu0 0.0
  %947 = vmatpush1.msra.mxu0 %v925
  %948 = vmatprep.subr.mxu0 0.0
  %949 = vmatpush1.msra.mxu0 %v926
  %950 = vmatprep.subr.mxu0 0.0
  %951 = vmatpush1.msra.mxu0 %v927
  %952 = vmatprep.subr.mxu0 0.0
  %953 = vmatpush1.msra.mxu0 %v928
  %954 = vmatprep.subr.mxu0 0.0
  %955 = vmatpush1.msra.mxu0 0.0
  %956 = vmatprep.subr.mxu0 0.0
  %957 = vmatpush1.msra.mxu0 0.0
  %958 = vmatprep.subr.mxu0 0.0
  %959 = vmatpush1.msra.mxu0 0.0
  %960 = vmatprep.subr.mxu0 0.0
  %961 = vmatpush1.msra.mxu0 0.0
  %962 = vmatprep.subr.mxu0 0.0
  %963 = vmatpush1.msra.mxu0 0.0
  %964 = vmatprep.subr.mxu0 0.0
  %965 = vmatpush1.msra.mxu0 0.0
  %966 = vmatprep.subr.mxu0 0.0
  %967 = vmatpush1.msra.mxu0 0.0
  %968 = vmatprep.subr.mxu0 0.0
  %969 = vmatpush1.msra.mxu0 0.0
  %970 = vmatprep.subr.mxu0 0.0
  %971 = vmatpush1.msra.mxu0 0.0
  %972 = vmatprep.subr.mxu0 0.0
  %973 = vmatpush1.msra.mxu0 0.0
  %974 = vmatprep.subr.mxu0 0.0
  %975 = vmatpush1.msra.mxu0 0.0
  %976 = vmatprep.subr.mxu0 0.0
  %977 = vmatpush1.msra.mxu0 0.0
  %978 = vmatprep.subr.mxu0 0.0
  %979 = vmatpush1.msra.mxu0 0.0
  %980 = vmatprep.subr.mxu0 0.0
  %981 = vmatpush1.msra.mxu0 0.0
  %982 = vmatprep.subr.mxu0 0.0
  %983 = vmatpush1.msra.mxu0 0.0
  %984 = vmatprep.subr.mxu0 0.0
  %985 = vmatpush1.msra.mxu0 0.0
  %986 = vmatprep.subr.mxu0 0.0
  %987 = vmatpush1.msra.mxu0 0.0
  %988 = vmatprep.subr.mxu0 0.0
  %989 = vmatpush1.msra.mxu0 0.0
  %990 = vmatprep.subr.mxu0 0.0
  %991 = vmatpush1.msra.mxu0 0.0
  %992 = vmatprep.subr.mxu0 0.0
  %993 = vmatpush1.msra.mxu0 0.0
  %994 = vmatprep.subr.mxu0 0.0
  %995 = vmatpush1.msra.mxu0 0.0
  %996 = vmatprep.subr.mxu0 0.0
  %997 = vmatpush1.msra.mxu0 0.0
  %998 = vmatprep.subr.mxu0 0.0
  %999 = vmatpush1.msra.mxu0 0.0
  %1000 = vmatprep.subr.mxu0 0.0
  %1001 = vmatpush1.msra.mxu0 0.0
  %1002 = vmatprep.subr.mxu0 0.0
  %1003 = vmatpush1.msra.mxu0 0.0
  %1004 = vmatprep.subr.mxu0 0.0
  %1005 = vmatpush1.msra.mxu0 0.0
  %1006 = vmatprep.subr.mxu0 0.0
  %1007 = vmatpush1.msra.mxu0 0.0
  %1008 = vmatprep.subr.mxu0 0.0
  %1009 = vmatpush1.msra.mxu0 0.0
  %1010 = vmatprep.mubr.f32.mxu0 0.0
  %1011 = vmatmul.mubr.f32.gmra.mrb[0].mxu0 %v935
  %v1012 = vpop.f32.mrb[0].mxu0
  %v1013 = vadd.f32 0.0, %v1012
  %v1014 = vpop.f32.mrb[0].mxu0
  %1015 = vmatprep.mubr.f32.mxu0 0.0
  %1016 = vmatmul.mubr.f32.gmra.mrb[0].mxu0 %v938
  %v1017 = vpop.f32.mrb[0].mxu0
  %v1018 = vadd.f32 0.0, %v1017
  %v1019 = vpop.f32.mrb[0].mxu0
  %1020 = vmatprep.mubr.f32.mxu0 0.0
  %1021 = vmatmul.mubr.f32.gmra.mrb[0].mxu0 %v941
  %v1022 = vpop.f32.mrb[0].mxu0
  %v1023 = vadd.f32 0.0, %v1022
  %v1024 = vpop.f32.mrb[0].mxu0
  %1025 = vmatprep.mubr.f32.mxu0 0.0
  %1026 = vmatmul.mubr.f32.gmra.mrb[0].mxu0 %v944
  %v1027 = vpop.f32.mrb[0].mxu0
  %v1028 = vadd.f32 0.0, %v1027
  %v1029 = vpop.f32.mrb[0].mxu0
  %1030 = vdwg.mxu0
  %v1031 = vadd.f32 %v713, %v1013
  %v1032 = vadd.f32 %v714, %v1018
  %v1033 = vadd.f32 %v715, %v1023
  %v1034 = vadd.f32 %v716, %v1028
  %1035 = vset.pattern.permute.xlu0 11
  %1036 = vperm.xlu0 %1035, %v20
  %v1037 = vpop.permute.xlu0 %1036
  %1039 = vset.pattern.permute.xlu0 11
  %1040 = vperm.xlu0 %1039, %v21
  %v1041 = vpop.permute.xlu0 %1040
  %1043 = vset.pattern.permute.xlu0 11
  %1044 = vperm.xlu0 %1043, %v22
  %v1045 = vpop.permute.xlu0 %1044
  %1047 = vset.pattern.permute.xlu0 11
  %1048 = vperm.xlu0 %1047, %v23
  %v1049 = vpop.permute.xlu0 %1048
  %v1051 = vadd.f32 %v1031, %v1037
  %v1052 = vadd.f32 %v1032, %v1041
  %v1053 = vadd.f32 %v1033, %v1045
  %v1054 = vadd.f32 %v1034, %v1049
  %v1055 = vadd.f32 %v1051, %v1052
  %v1056 = vadd.f32 %v1055, %v1053
  %v1057 = vadd.f32 %v1056, %v1054
  %v1058 = vrot.slane %v1057, 4
  %v1059 = vadd.f32 %v1057, %v1058
  %v1060 = vrot.slane %v1059, 2
  %v1061 = vadd.f32 %v1059, %v1060
  %v1062 = vrot.slane %v1061, 1
  %v1063 = vadd.f32 %v1061, %v1062
  %v1064 = vmul.f32 %v1063, %v45
  %v1065 = vsub.f32 %v1051, %v1064
  %v1066 = vsub.f32 %v1052, %v1064
  %v1067 = vsub.f32 %v1053, %v1064
  %v1068 = vsub.f32 %v1054, %v1064
  %v1069 = vmul.f32 %v1065, %v1065
  %v1070 = vmul.f32 %v1066, %v1066
  %v1071 = vmul.f32 %v1067, %v1067
  %v1072 = vmul.f32 %v1068, %v1068
  %v1073 = vadd.f32 %v1069, %v1070
  %v1074 = vadd.f32 %v1073, %v1071
  %v1075 = vadd.f32 %v1074, %v1072
  %v1076 = vrot.slane %v1075, 4
  %v1077 = vadd.f32 %v1075, %v1076
  %v1078 = vrot.slane %v1077, 2
  %v1079 = vadd.f32 %v1077, %v1078
  %v1080 = vrot.slane %v1079, 1
  %v1081 = vadd.f32 %v1079, %v1080
  %v1082 = vmul.f32 %v1081, %v45
  %v1083 = vadd.f32 %v1082, 1e-05
  %v1084 = vrsqrt.pop %v1083
  %v1085 = vmul.f32 %v1065, %v1084
  %v1086 = vmul.f32 %v1066, %v1084
  %v1087 = vmul.f32 %v1067, %v1084
  %v1088 = vmul.f32 %v1068, %v1084
  %1089 = vset.pattern.permute.xlu0 12
  %1090 = vperm.xlu0 %1089, %v20
  %v1091 = vpop.permute.xlu0 %1090
  %1093 = vset.pattern.permute.xlu0 12
  %1094 = vperm.xlu0 %1093, %v21
  %v1095 = vpop.permute.xlu0 %1094
  %1097 = vset.pattern.permute.xlu0 12
  %1098 = vperm.xlu0 %1097, %v22
  %v1099 = vpop.permute.xlu0 %1098
  %1101 = vset.pattern.permute.xlu0 12
  %1102 = vperm.xlu0 %1101, %v23
  %v1103 = vpop.permute.xlu0 %1102
  %v1105 = vmul.f32 %v1085, %v1091
  %v1106 = vmul.f32 %v1086, %v1095
  %v1107 = vmul.f32 %v1087, %v1099
  %v1108 = vmul.f32 %v1088, %v1103
  %1109 = vset.pattern.permute.xlu0 13
  %1110 = vperm.xlu0 %1109, %v20
  %v1111 = vpop.permute.xlu0 %1110
  %1113 = vset.pattern.permute.xlu0 13
  %1114 = vperm.xlu0 %1113, %v21
  %v1115 = vpop.permute.xlu0 %1114
  %1117 = vset.pattern.permute.xlu0 13
  %1118 = vperm.xlu0 %1117, %v22
  %v1119 = vpop.permute.xlu0 %1118
  %1121 = vset.pattern.permute.xlu0 13
  %1122 = vperm.xlu0 %1121, %v23
  %v1123 = vpop.permute.xlu0 %1122
  %v1125 = vadd.f32 %v1105, %v1111
  %v1126 = vadd.f32 %v1106, %v1115
  %v1127 = vadd.f32 %v1107, %v1119
  %v1128 = vadd.f32 %v1108, %v1123
  %s1129 = scalar_lea.vmem %s2, 192
  %v1130 = vld [vmem:[%s1129] sm:$0xff]
  %v1131 = vld [vmem:[%s1129 + $0x8] sm:$0xff]
  %v1132 = vld [vmem:[%s1129 + $0x10] sm:$0xff]
  %v1133 = vld [vmem:[%s1129 + $0x18] sm:$0xff]
  %1134 = vset.pattern.permute.xlu0 14
  %1135 = vperm.xlu0 %1134, %v20
  %v1136 = vpop.permute.xlu0 %1135
  %1138 = vset.pattern.permute.xlu0 14
  %1139 = vperm.xlu0 %1138, %v21
  %v1140 = vpop.permute.xlu0 %1139
  %1142 = vset.pattern.permute.xlu0 14
  %1143 = vperm.xlu0 %1142, %v22
  %v1144 = vpop.permute.xlu0 %1143
  %1146 = vset.pattern.permute.xlu0 14
  %1147 = vperm.xlu0 %1146, %v23
  %v1148 = vpop.permute.xlu0 %1147
  %v1151 = vsel %vm135, %v1130, 0
  %v1154 = vsel %vm135, %v1131, 0
  %v1157 = vsel %vm135, %v1132, 0
  %v1160 = vsel %vm135, %v1133, 0
  %1162 = vmatprep.subr.mxu0 0.0
  %1163 = vmatpush1.msra.mxu0 %v1125
  %1164 = vmatprep.subr.mxu0 0.0
  %1165 = vmatpush1.msra.mxu0 %v1126
  %1166 = vmatprep.subr.mxu0 0.0
  %1167 = vmatpush1.msra.mxu0 %v1127
  %1168 = vmatprep.subr.mxu0 0.0
  %1169 = vmatpush1.msra.mxu0 %v1128
  %1170 = vmatprep.subr.mxu0 0.0
  %1171 = vmatpush1.msra.mxu0 0.0
  %1172 = vmatprep.subr.mxu0 0.0
  %1173 = vmatpush1.msra.mxu0 0.0
  %1174 = vmatprep.subr.mxu0 0.0
  %1175 = vmatpush1.msra.mxu0 0.0
  %1176 = vmatprep.subr.mxu0 0.0
  %1177 = vmatpush1.msra.mxu0 0.0
  %1178 = vmatprep.subr.mxu0 0.0
  %1179 = vmatpush1.msra.mxu0 0.0
  %1180 = vmatprep.subr.mxu0 0.0
  %1181 = vmatpush1.msra.mxu0 0.0
  %1182 = vmatprep.subr.mxu0 0.0
  %1183 = vmatpush1.msra.mxu0 0.0
  %1184 = vmatprep.subr.mxu0 0.0
  %1185 = vmatpush1.msra.mxu0 0.0
  %1186 = vmatprep.subr.mxu0 0.0
  %1187 = vmatpush1.msra.mxu0 0.0
  %1188 = vmatprep.subr.mxu0 0.0
  %1189 = vmatpush1.msra.mxu0 0.0
  %1190 = vmatprep.subr.mxu0 0.0
  %1191 = vmatpush1.msra.mxu0 0.0
  %1192 = vmatprep.subr.mxu0 0.0
  %1193 = vmatpush1.msra.mxu0 0.0
  %1194 = vmatprep.subr.mxu0 0.0
  %1195 = vmatpush1.msra.mxu0 0.0
  %1196 = vmatprep.subr.mxu0 0.0
  %1197 = vmatpush1.msra.mxu0 0.0
  %1198 = vmatprep.subr.mxu0 0.0
  %1199 = vmatpush1.msra.mxu0 0.0
  %1200 = vmatprep.subr.mxu0 0.0
  %1201 = vmatpush1.msra.mxu0 0.0
  %1202 = vmatprep.subr.mxu0 0.0
  %1203 = vmatpush1.msra.mxu0 0.0
  %1204 = vmatprep.subr.mxu0 0.0
  %1205 = vmatpush1.msra.mxu0 0.0
  %1206 = vmatprep.subr.mxu0 0.0
  %1207 = vmatpush1.msra.mxu0 0.0
  %1208 = vmatprep.subr.mxu0 0.0
  %1209 = vmatpush1.msra.mxu0 0.0
  %1210 = vmatprep.subr.mxu0 0.0
  %1211 = vmatpush1.msra.mxu0 0.0
  %1212 = vmatprep.subr.mxu0 0.0
  %1213 = vmatpush1.msra.mxu0 0.0
  %1214 = vmatprep.subr.mxu0 0.0
  %1215 = vmatpush1.msra.mxu0 0.0
  %1216 = vmatprep.subr.mxu0 0.0
  %1217 = vmatpush1.msra.mxu0 0.0
  %1218 = vmatprep.subr.mxu0 0.0
  %1219 = vmatpush1.msra.mxu0 0.0
  %1220 = vmatprep.subr.mxu0 0.0
  %1221 = vmatpush1.msra.mxu0 0.0
  %1222 = vmatprep.subr.mxu0 0.0
  %1223 = vmatpush1.msra.mxu0 0.0
  %1224 = vmatprep.subr.mxu0 0.0
  %1225 = vmatpush1.msra.mxu0 0.0
  %1226 = vmatprep.mubr.f32.mxu0 0.0
  %1227 = vmatmul.mubr.f32.gmra.mrb[0].mxu0 %v1151
  %v1228 = vpop.f32.mrb[0].mxu0
  %v1229 = vadd.f32 %v1136, %v1228
  %v1230 = vpop.f32.mrb[0].mxu0
  %1231 = vmatprep.mubr.f32.mxu0 0.0
  %1232 = vmatmul.mubr.f32.gmra.mrb[0].mxu0 %v1154
  %v1233 = vpop.f32.mrb[0].mxu0
  %v1234 = vadd.f32 %v1140, %v1233
  %v1235 = vpop.f32.mrb[0].mxu0
  %1236 = vmatprep.mubr.f32.mxu0 0.0
  %1237 = vmatmul.mubr.f32.gmra.mrb[0].mxu0 %v1157
  %v1238 = vpop.f32.mrb[0].mxu0
  %v1239 = vadd.f32 %v1144, %v1238
  %v1240 = vpop.f32.mrb[0].mxu0
  %1241 = vmatprep.mubr.f32.mxu0 0.0
  %1242 = vmatmul.mubr.f32.gmra.mrb[0].mxu0 %v1160
  %v1243 = vpop.f32.mrb[0].mxu0
  %v1244 = vadd.f32 %v1148, %v1243
  %v1245 = vpop.f32.mrb[0].mxu0
  %1246 = vdwg.mxu0
  %v1247 = vmul.f32 %v1229, 0.5
  %v1248 = vmul.f32 %v1234, 0.5
  %v1249 = vmul.f32 %v1239, 0.5
  %v1250 = vmul.f32 %v1244, 0.5
  %v1251 = vmul.f32 %v1229, 0.70710677
  %v1252 = vmul.f32 %v1234, 0.70710677
  %v1253 = vmul.f32 %v1239, 0.70710677
  %v1254 = vmul.f32 %v1244, 0.70710677
  %v1255 = verf.f32.pop %v1251
  %v1256 = verf.f32.pop %v1252
  %v1257 = verf.f32.pop %v1253
  %v1258 = verf.f32.pop %v1254
  %v1259 = vadd.f32 %v1255, 1.0
  %v1260 = vadd.f32 %v1256, 1.0
  %v1261 = vadd.f32 %v1257, 1.0
  %v1262 = vadd.f32 %v1258, 1.0
  %v1263 = vmul.f32 %v1247, %v1259
  %v1264 = vmul.f32 %v1248, %v1260
  %v1265 = vmul.f32 %v1249, %v1261
  %v1266 = vmul.f32 %v1250, %v1262
  %s1267 = scalar_lea.vmem %s2, 224
  %v1268 = vld [vmem:[%s1267] sm:$0xff]
  %v1269 = vld [vmem:[%s1267 + $0x8] sm:$0xff]
  %v1270 = vld [vmem:[%s1267 + $0x10] sm:$0xff]
  %v1271 = vld [vmem:[%s1267 + $0x18] sm:$0xff]
  %v1273 = vsel %vm135, %v1268, 0
  %v1276 = vsel %vm135, %v1269, 0
  %v1279 = vsel %vm135, %v1270, 0
  %v1282 = vsel %vm135, %v1271, 0
  %1284 = vmatprep.subr.mxu0 0.0
  %1285 = vmatpush1.msra.mxu0 %v1263
  %1286 = vmatprep.subr.mxu0 0.0
  %1287 = vmatpush1.msra.mxu0 %v1264
  %1288 = vmatprep.subr.mxu0 0.0
  %1289 = vmatpush1.msra.mxu0 %v1265
  %1290 = vmatprep.subr.mxu0 0.0
  %1291 = vmatpush1.msra.mxu0 %v1266
  %1292 = vmatprep.subr.mxu0 0.0
  %1293 = vmatpush1.msra.mxu0 0.0
  %1294 = vmatprep.subr.mxu0 0.0
  %1295 = vmatpush1.msra.mxu0 0.0
  %1296 = vmatprep.subr.mxu0 0.0
  %1297 = vmatpush1.msra.mxu0 0.0
  %1298 = vmatprep.subr.mxu0 0.0
  %1299 = vmatpush1.msra.mxu0 0.0
  %1300 = vmatprep.subr.mxu0 0.0
  %1301 = vmatpush1.msra.mxu0 0.0
  %1302 = vmatprep.subr.mxu0 0.0
  %1303 = vmatpush1.msra.mxu0 0.0
  %1304 = vmatprep.subr.mxu0 0.0
  %1305 = vmatpush1.msra.mxu0 0.0
  %1306 = vmatprep.subr.mxu0 0.0
  %1307 = vmatpush1.msra.mxu0 0.0
  %1308 = vmatprep.subr.mxu0 0.0
  %1309 = vmatpush1.msra.mxu0 0.0
  %1310 = vmatprep.subr.mxu0 0.0
  %1311 = vmatpush1.msra.mxu0 0.0
  %1312 = vmatprep.subr.mxu0 0.0
  %1313 = vmatpush1.msra.mxu0 0.0
  %1314 = vmatprep.subr.mxu0 0.0
  %1315 = vmatpush1.msra.mxu0 0.0
  %1316 = vmatprep.subr.mxu0 0.0
  %1317 = vmatpush1.msra.mxu0 0.0
  %1318 = vmatprep.subr.mxu0 0.0
  %1319 = vmatpush1.msra.mxu0 0.0
  %1320 = vmatprep.subr.mxu0 0.0
  %1321 = vmatpush1.msra.mxu0 0.0
  %1322 = vmatprep.subr.mxu0 0.0
  %1323 = vmatpush1.msra.mxu0 0.0
  %1324 = vmatprep.subr.mxu0 0.0
  %1325 = vmatpush1.msra.mxu0 0.0
  %1326 = vmatprep.subr.mxu0 0.0
  %1327 = vmatpush1.msra.mxu0 0.0
  %1328 = vmatprep.subr.mxu0 0.0
  %1329 = vmatpush1.msra.mxu0 0.0
  %1330 = vmatprep.subr.mxu0 0.0
  %1331 = vmatpush1.msra.mxu0 0.0
  %1332 = vmatprep.subr.mxu0 0.0
  %1333 = vmatpush1.msra.mxu0 0.0
  %1334 = vmatprep.subr.mxu0 0.0
  %1335 = vmatpush1.msra.mxu0 0.0
  %1336 = vmatprep.subr.mxu0 0.0
  %1337 = vmatpush1.msra.mxu0 0.0
  %1338 = vmatprep.subr.mxu0 0.0
  %1339 = vmatpush1.msra.mxu0 0.0
  %1340 = vmatprep.subr.mxu0 0.0
  %1341 = vmatpush1.msra.mxu0 0.0
  %1342 = vmatprep.subr.mxu0 0.0
  %1343 = vmatpush1.msra.mxu0 0.0
  %1344 = vmatprep.subr.mxu0 0.0
  %1345 = vmatpush1.msra.mxu0 0.0
  %1346 = vmatprep.subr.mxu0 0.0
  %1347 = vmatpush1.msra.mxu0 0.0
  %1348 = vmatprep.mubr.f32.mxu0 0.0
  %1349 = vmatmul.mubr.f32.gmra.mrb[0].mxu0 %v1273
  %v1350 = vpop.f32.mrb[0].mxu0
  %v1351 = vadd.f32 0.0, %v1350
  %v1352 = vpop.f32.mrb[0].mxu0
  %1353 = vmatprep.mubr.f32.mxu0 0.0
  %1354 = vmatmul.mubr.f32.gmra.mrb[0].mxu0 %v1276
  %v1355 = vpop.f32.mrb[0].mxu0
  %v1356 = vadd.f32 0.0, %v1355
  %v1357 = vpop.f32.mrb[0].mxu0
  %1358 = vmatprep.mubr.f32.mxu0 0.0
  %1359 = vmatmul.mubr.f32.gmra.mrb[0].mxu0 %v1279
  %v1360 = vpop.f32.mrb[0].mxu0
  %v1361 = vadd.f32 0.0, %v1360
  %v1362 = vpop.f32.mrb[0].mxu0
  %1363 = vmatprep.mubr.f32.mxu0 0.0
  %1364 = vmatmul.mubr.f32.gmra.mrb[0].mxu0 %v1282
  %v1365 = vpop.f32.mrb[0].mxu0
  %v1366 = vadd.f32 0.0, %v1365
  %v1367 = vpop.f32.mrb[0].mxu0
  %1368 = vdwg.mxu0
  %v1369 = vadd.f32 %v1051, %v1351
  %v1370 = vadd.f32 %v1052, %v1356
  %v1371 = vadd.f32 %v1053, %v1361
  %v1372 = vadd.f32 %v1054, %v1366
  %1373 = vset.pattern.permute.xlu0 15
  %1374 = vperm.xlu0 %1373, %v20
  %v1375 = vpop.permute.xlu0 %1374
  %1377 = vset.pattern.permute.xlu0 15
  %1378 = vperm.xlu0 %1377, %v21
  %v1379 = vpop.permute.xlu0 %1378
  %1381 = vset.pattern.permute.xlu0 15
  %1382 = vperm.xlu0 %1381, %v22
  %v1383 = vpop.permute.xlu0 %1382
  %1385 = vset.pattern.permute.xlu0 15
  %1386 = vperm.xlu0 %1385, %v23
  %v1387 = vpop.permute.xlu0 %1386
  %v1389 = vadd.f32 %v1369, %v1375
  %v1390 = vadd.f32 %v1370, %v1379
  %v1391 = vadd.f32 %v1371, %v1383
  %v1392 = vadd.f32 %v1372, %v1387
  %v1393 = vsel %vm135, %v1389, 0.0
  %v1394 = vsel %vm135, %v1390, 0.0
  %v1395 = vadd.f32 %v1393, %v1394
  %v1396 = vsel %vm135, %v1391, 0.0
  %v1397 = vadd.f32 %v1395, %v1396
  %v1398 = vsel %vm135, %v1392, 0.0
  %v1399 = vadd.f32 %v1397, %v1398
  %v1400 = vrot.slane %v1399, 4
  %v1401 = vadd.f32 %v1399, %v1400
  %v1402 = vrot.slane %v1401, 2
  %v1403 = vadd.f32 %v1401, %v1402
  %v1404 = vrot.slane %v1403, 1
  %v1405 = vadd.f32 %v1403, %v1404
  %v1406 = vadd.f32 %v1405, 0.0
  %vm1407 = vcmask 523520
  %v1408 = vsel %vm1407, %v1389, 0.0
  %v1409 = vsel %vm1407, %v1390, 0.0
  %v1410 = vadd.f32 %v1408, %v1409
  %v1411 = vsel %vm1407, %v1391, 0.0
  %v1412 = vadd.f32 %v1410, %v1411
  %v1413 = vsel %vm1407, %v1392, 0.0
  %v1414 = vadd.f32 %v1412, %v1413
  %v1415 = vrot.slane %v1414, 4
  %v1416 = vadd.f32 %v1414, %v1415
  %v1417 = vrot.slane %v1416, 2
  %v1418 = vadd.f32 %v1416, %v1417
  %v1419 = vrot.slane %v1418, 1
  %v1420 = vadd.f32 %v1418, %v1419
  %1422 = vrot.lane.b32.xlu0 %v1420, 96
  %v1423 = vpop.permute.xlu0 %1422
  %v1425 = vadd.f32 %v1406, %v1423
  %vm1426 = vcmask 785920
  %v1427 = vsel %vm1426, %v1389, 0.0
  %v1428 = vsel %vm1426, %v1390, 0.0
  %v1429 = vadd.f32 %v1427, %v1428
  %v1430 = vsel %vm1426, %v1391, 0.0
  %v1431 = vadd.f32 %v1429, %v1430
  %v1432 = vsel %vm1426, %v1392, 0.0
  %v1433 = vadd.f32 %v1431, %v1432
  %v1434 = vrot.slane %v1433, 4
  %v1435 = vadd.f32 %v1433, %v1434
  %v1436 = vrot.slane %v1435, 2
  %v1437 = vadd.f32 %v1435, %v1436
  %v1438 = vrot.slane %v1437, 1
  %v1439 = vadd.f32 %v1437, %v1438
  %1441 = vrot.lane.b32.xlu0 %v1439, 64
  %v1442 = vpop.permute.xlu0 %1441
  %v1444 = vadd.f32 %v1425, %v1442
  %vm1445 = vcmask 1048320
  %v1446 = vsel %vm1445, %v1389, 0.0
  %v1447 = vsel %vm1445, %v1390, 0.0
  %v1448 = vadd.f32 %v1446, %v1447
  %v1449 = vsel %vm1445, %v1391, 0.0
  %v1450 = vadd.f32 %v1448, %v1449
  %v1451 = vsel %vm1445, %v1392, 0.0
  %v1452 = vadd.f32 %v1450, %v1451
  %v1453 = vrot.slane %v1452, 4
  %v1454 = vadd.f32 %v1452, %v1453
  %v1455 = vrot.slane %v1454, 2
  %v1456 = vadd.f32 %v1454, %v1455
  %v1457 = vrot.slane %v1456, 1
  %v1458 = vadd.f32 %v1456, %v1457
  %1460 = vrot.lane.b32.xlu0 %v1458, 32
  %v1461 = vpop.permute.xlu0 %1460
  %v1463 = vadd.f32 %v1444, %v1461
  %v1464 = vmul.f32 %v1463, 0.0078125
  %v1465 = vlaneseq
  %v1466 = vshrl.u32 %v1465, 7
  %v1467 = vsub.s32 0, %v1466
  %v1468 = vrot.slane %v1464, %v1467
  %v1469 = vsub.f32 %v1389, %v1468
  %v1470 = vsub.f32 %v1390, %v1468
  %v1471 = vsub.f32 %v1391, %v1468
  %v1472 = vsub.f32 %v1392, %v1468
  %v1473 = vmul.f32 %v1469, %v1469
  %v1474 = vmul.f32 %v1470, %v1470
  %v1475 = vmul.f32 %v1471, %v1471
  %v1476 = vmul.f32 %v1472, %v1472
  %v1477 = vsel %vm135, %v1473, 0.0
  %v1478 = vsel %vm135, %v1474, 0.0
  %v1479 = vadd.f32 %v1477, %v1478
  %v1480 = vsel %vm135, %v1475, 0.0
  %v1481 = vadd.f32 %v1479, %v1480
  %v1482 = vsel %vm135, %v1476, 0.0
  %v1483 = vadd.f32 %v1481, %v1482
  %v1484 = vrot.slane %v1483, 4
  %v1485 = vadd.f32 %v1483, %v1484
  %v1486 = vrot.slane %v1485, 2
  %v1487 = vadd.f32 %v1485, %v1486
  %v1488 = vrot.slane %v1487, 1
  %v1489 = vadd.f32 %v1487, %v1488
  %v1490 = vadd.f32 %v1489, 0.0
  %1492 = vrot.lane.b32.xlu0 %v1468, 32
  %v1493 = vpop.permute.xlu0 %1492
  %v1495 = vsub.f32 %v1389, %v1493
  %v1496 = vsub.f32 %v1390, %v1493
  %v1497 = vsub.f32 %v1391, %v1493
  %v1498 = vsub.f32 %v1392, %v1493
  %v1499 = vmul.f32 %v1495, %v1495
  %v1500 = vmul.f32 %v1496, %v1496
  %v1501 = vmul.f32 %v1497, %v1497
  %v1502 = vmul.f32 %v1498, %v1498
  %v1503 = vsel %vm1407, %v1499, 0.0
  %v1504 = vsel %vm1407, %v1500, 0.0
  %v1505 = vadd.f32 %v1503, %v1504
  %v1506 = vsel %vm1407, %v1501, 0.0
  %v1507 = vadd.f32 %v1505, %v1506
  %v1508 = vsel %vm1407, %v1502, 0.0
  %v1509 = vadd.f32 %v1507, %v1508
  %v1510 = vrot.slane %v1509, 4
  %v1511 = vadd.f32 %v1509, %v1510
  %v1512 = vrot.slane %v1511, 2
  %v1513 = vadd.f32 %v1511, %v1512
  %v1514 = vrot.slane %v1513, 1
  %v1515 = vadd.f32 %v1513, %v1514
  %1517 = vrot.lane.b32.xlu0 %v1515, 96
  %v1518 = vpop.permute.xlu0 %1517
  %v1520 = vadd.f32 %v1490, %v1518
  %1521 = vrot.lane.b32.xlu0 %v1468, 64
  %v1522 = vpop.permute.xlu0 %1521
  %v1524 = vsub.f32 %v1389, %v1522
  %v1525 = vsub.f32 %v1390, %v1522
  %v1526 = vsub.f32 %v1391, %v1522
  %v1527 = vsub.f32 %v1392, %v1522
  %v1528 = vmul.f32 %v1524, %v1524
  %v1529 = vmul.f32 %v1525, %v1525
  %v1530 = vmul.f32 %v1526, %v1526
  %v1531 = vmul.f32 %v1527, %v1527
  %v1532 = vsel %vm1426, %v1528, 0.0
  %v1533 = vsel %vm1426, %v1529, 0.0
  %v1534 = vadd.f32 %v1532, %v1533
  %v1535 = vsel %vm1426, %v1530, 0.0
  %v1536 = vadd.f32 %v1534, %v1535
  %v1537 = vsel %vm1426, %v1531, 0.0
  %v1538 = vadd.f32 %v1536, %v1537
  %v1539 = vrot.slane %v1538, 4
  %v1540 = vadd.f32 %v1538, %v1539
  %v1541 = vrot.slane %v1540, 2
  %v1542 = vadd.f32 %v1540, %v1541
  %v1543 = vrot.slane %v1542, 1
  %v1544 = vadd.f32 %v1542, %v1543
  %1546 = vrot.lane.b32.xlu0 %v1544, 64
  %v1547 = vpop.permute.xlu0 %1546
  %v1549 = vadd.f32 %v1520, %v1547
  %1550 = vrot.lane.b32.xlu0 %v1468, 96
  %v1551 = vpop.permute.xlu0 %1550
  %v1553 = vsub.f32 %v1389, %v1551
  %v1554 = vsub.f32 %v1390, %v1551
  %v1555 = vsub.f32 %v1391, %v1551
  %v1556 = vsub.f32 %v1392, %v1551
  %v1557 = vmul.f32 %v1553, %v1553
  %v1558 = vmul.f32 %v1554, %v1554
  %v1559 = vmul.f32 %v1555, %v1555
  %v1560 = vmul.f32 %v1556, %v1556
  %v1561 = vsel %vm1445, %v1557, 0.0
  %v1562 = vsel %vm1445, %v1558, 0.0
  %v1563 = vadd.f32 %v1561, %v1562
  %v1564 = vsel %vm1445, %v1559, 0.0
  %v1565 = vadd.f32 %v1563, %v1564
  %v1566 = vsel %vm1445, %v1560, 0.0
  %v1567 = vadd.f32 %v1565, %v1566
  %v1568 = vrot.slane %v1567, 4
  %v1569 = vadd.f32 %v1567, %v1568
  %v1570 = vrot.slane %v1569, 2
  %v1571 = vadd.f32 %v1569, %v1570
  %v1572 = vrot.slane %v1571, 1
  %v1573 = vadd.f32 %v1571, %v1572
  %1575 = vrot.lane.b32.xlu0 %v1573, 32
  %v1576 = vpop.permute.xlu0 %1575
  %v1578 = vadd.f32 %v1549, %v1576
  %v1579 = vmul.f32 %v1578, 0.0078125
  %v1580 = vadd.f32 %v1579, 1e-05
  %v1581 = vrsqrt.pop %v1580
  %v1582 = vlaneseq
  %v1583 = vshrl.u32 %v1582, 7
  %v1584 = vsub.s32 0, %v1583
  %v1585 = vrot.slane %v1581, %v1584
  %v1586 = vmul.f32 %v1469, %v1585
  %v1587 = vmul.f32 %v1470, %v1585
  %v1588 = vmul.f32 %v1471, %v1585
  %v1589 = vmul.f32 %v1472, %v1585
  %1590 = vset.pattern.permute.xlu0 16
  %1591 = vperm.xlu0 %1590, %v20
  %v1592 = vpop.permute.xlu0 %1591
  %1594 = vset.pattern.permute.xlu0 16
  %1595 = vperm.xlu0 %1594, %v21
  %v1596 = vpop.permute.xlu0 %1595
  %1598 = vset.pattern.permute.xlu0 16
  %1599 = vperm.xlu0 %1598, %v22
  %v1600 = vpop.permute.xlu0 %1599
  %1602 = vset.pattern.permute.xlu0 16
  %1603 = vperm.xlu0 %1602, %v23
  %v1604 = vpop.permute.xlu0 %1603
  %v1606 = vmul.f32 %v1586, %v1592
  %v1607 = vmul.f32 %v1587, %v1596
  %v1608 = vmul.f32 %v1588, %v1600
  %v1609 = vmul.f32 %v1589, %v1604
  %1610 = vset.pattern.permute.xlu0 20
  %1611 = vperm.xlu0 %1610, %v20
  %v1612 = vpop.permute.xlu0 %1611
  %1614 = vset.pattern.permute.xlu0 20
  %1615 = vperm.xlu0 %1614, %v21
  %v1616 = vpop.permute.xlu0 %1615
  %1618 = vset.pattern.permute.xlu0 20
  %1619 = vperm.xlu0 %1618, %v22
  %v1620 = vpop.permute.xlu0 %1619
  %1622 = vset.pattern.permute.xlu0 20
  %1623 = vperm.xlu0 %1622, %v23
  %v1624 = vpop.permute.xlu0 %1623
  %v1626 = vadd.f32 %v1606, %v1612
  %v1627 = vadd.f32 %v1607, %v1616
  %v1628 = vadd.f32 %v1608, %v1620
  %v1629 = vadd.f32 %v1609, %v1624
  %1631 = vrot.lane.b32.xlu0 %v1585, 32
  %v1632 = vpop.permute.xlu0 %1631
  %v1634 = vmul.f32 %v1495, %v1632
  %v1635 = vmul.f32 %v1496, %v1632
  %v1636 = vmul.f32 %v1497, %v1632
  %v1637 = vmul.f32 %v1498, %v1632
  %1638 = vset.pattern.permute.xlu0 17
  %1639 = vperm.xlu0 %1638, %v20
  %v1640 = vpop.permute.xlu0 %1639
  %1642 = vset.pattern.permute.xlu0 17
  %1643 = vperm.xlu0 %1642, %v21
  %v1644 = vpop.permute.xlu0 %1643
  %1646 = vset.pattern.permute.xlu0 17
  %1647 = vperm.xlu0 %1646, %v22
  %v1648 = vpop.permute.xlu0 %1647
  %1650 = vset.pattern.permute.xlu0 17
  %1651 = vperm.xlu0 %1650, %v23
  %v1652 = vpop.permute.xlu0 %1651
  %v1654 = vmul.f32 %v1634, %v1640
  %v1655 = vmul.f32 %v1635, %v1644
  %v1656 = vmul.f32 %v1636, %v1648
  %v1657 = vmul.f32 %v1637, %v1652
  %1658 = vset.pattern.permute.xlu0 21
  %1659 = vperm.xlu0 %1658, %v20
  %v1660 = vpop.permute.xlu0 %1659
  %1662 = vset.pattern.permute.xlu0 21
  %1663 = vperm.xlu0 %1662, %v21
  %v1664 = vpop.permute.xlu0 %1663
  %1666 = vset.pattern.permute.xlu0 21
  %1667 = vperm.xlu0 %1666, %v22
  %v1668 = vpop.permute.xlu0 %1667
  %1670 = vset.pattern.permute.xlu0 21
  %1671 = vperm.xlu0 %1670, %v23
  %v1672 = vpop.permute.xlu0 %1671
  %v1674 = vadd.f32 %v1654, %v1660
  %v1675 = vadd.f32 %v1655, %v1664
  %v1676 = vadd.f32 %v1656, %v1668
  %v1677 = vadd.f32 %v1657, %v1672
  %1678 = vrot.lane.b32.xlu0 %v1585, 64
  %v1679 = vpop.permute.xlu0 %1678
  %v1681 = vmul.f32 %v1524, %v1679
  %v1682 = vmul.f32 %v1525, %v1679
  %v1683 = vmul.f32 %v1526, %v1679
  %v1684 = vmul.f32 %v1527, %v1679
  %1685 = vset.pattern.permute.xlu0 18
  %1686 = vperm.xlu0 %1685, %v20
  %v1687 = vpop.permute.xlu0 %1686
  %1689 = vset.pattern.permute.xlu0 18
  %1690 = vperm.xlu0 %1689, %v21
  %v1691 = vpop.permute.xlu0 %1690
  %1693 = vset.pattern.permute.xlu0 18
  %1694 = vperm.xlu0 %1693, %v22
  %v1695 = vpop.permute.xlu0 %1694
  %1697 = vset.pattern.permute.xlu0 18
  %1698 = vperm.xlu0 %1697, %v23
  %v1699 = vpop.permute.xlu0 %1698
  %v1701 = vmul.f32 %v1681, %v1687
  %v1702 = vmul.f32 %v1682, %v1691
  %v1703 = vmul.f32 %v1683, %v1695
  %v1704 = vmul.f32 %v1684, %v1699
  %1705 = vset.pattern.permute.xlu0 22
  %1706 = vperm.xlu0 %1705, %v20
  %v1707 = vpop.permute.xlu0 %1706
  %1709 = vset.pattern.permute.xlu0 22
  %1710 = vperm.xlu0 %1709, %v21
  %v1711 = vpop.permute.xlu0 %1710
  %1713 = vset.pattern.permute.xlu0 22
  %1714 = vperm.xlu0 %1713, %v22
  %v1715 = vpop.permute.xlu0 %1714
  %1717 = vset.pattern.permute.xlu0 22
  %1718 = vperm.xlu0 %1717, %v23
  %v1719 = vpop.permute.xlu0 %1718
  %v1721 = vadd.f32 %v1701, %v1707
  %v1722 = vadd.f32 %v1702, %v1711
  %v1723 = vadd.f32 %v1703, %v1715
  %v1724 = vadd.f32 %v1704, %v1719
  %1725 = vrot.lane.b32.xlu0 %v1585, 96
  %v1726 = vpop.permute.xlu0 %1725
  %v1728 = vmul.f32 %v1553, %v1726
  %v1729 = vmul.f32 %v1554, %v1726
  %v1730 = vmul.f32 %v1555, %v1726
  %v1731 = vmul.f32 %v1556, %v1726
  %1732 = vset.pattern.permute.xlu0 19
  %1733 = vperm.xlu0 %1732, %v20
  %v1734 = vpop.permute.xlu0 %1733
  %1736 = vset.pattern.permute.xlu0 19
  %1737 = vperm.xlu0 %1736, %v21
  %v1738 = vpop.permute.xlu0 %1737
  %1740 = vset.pattern.permute.xlu0 19
  %1741 = vperm.xlu0 %1740, %v22
  %v1742 = vpop.permute.xlu0 %1741
  %1744 = vset.pattern.permute.xlu0 19
  %1745 = vperm.xlu0 %1744, %v23
  %v1746 = vpop.permute.xlu0 %1745
  %v1748 = vmul.f32 %v1728, %v1734
  %v1749 = vmul.f32 %v1729, %v1738
  %v1750 = vmul.f32 %v1730, %v1742
  %v1751 = vmul.f32 %v1731, %v1746
  %1752 = vset.pattern.permute.xlu0 23
  %1753 = vperm.xlu0 %1752, %v20
  %v1754 = vpop.permute.xlu0 %1753
  %1756 = vset.pattern.permute.xlu0 23
  %1757 = vperm.xlu0 %1756, %v21
  %v1758 = vpop.permute.xlu0 %1757
  %1760 = vset.pattern.permute.xlu0 23
  %1761 = vperm.xlu0 %1760, %v22
  %v1762 = vpop.permute.xlu0 %1761
  %1764 = vset.pattern.permute.xlu0 23
  %1765 = vperm.xlu0 %1764, %v23
  %v1766 = vpop.permute.xlu0 %1765
  %v1768 = vadd.f32 %v1748, %v1754
  %v1769 = vadd.f32 %v1749, %v1758
  %v1770 = vadd.f32 %v1750, %v1762
  %v1771 = vadd.f32 %v1751, %v1766
  %1776 = vrot.lane.b32.xlu0 %v1674, 96
  %v1777 = vpop.permute.xlu0 %1776
  %1778 = vrot.lane.b32.xlu0 %v1675, 96
  %v1779 = vpop.permute.xlu0 %1778
  %1780 = vrot.lane.b32.xlu0 %v1676, 96
  %v1781 = vpop.permute.xlu0 %1780
  %1782 = vrot.lane.b32.xlu0 %v1677, 96
  %v1783 = vpop.permute.xlu0 %1782
  %1792 = vrot.lane.b32.xlu0 %v1721, 64
  %v1793 = vpop.permute.xlu0 %1792
  %1794 = vrot.lane.b32.xlu0 %v1722, 64
  %v1795 = vpop.permute.xlu0 %1794
  %1796 = vrot.lane.b32.xlu0 %v1723, 64
  %v1797 = vpop.permute.xlu0 %1796
  %1798 = vrot.lane.b32.xlu0 %v1724, 64
  %v1799 = vpop.permute.xlu0 %1798
  %1808 = vrot.lane.b32.xlu0 %v1768, 32
  %v1809 = vpop.permute.xlu0 %1808
  %1810 = vrot.lane.b32.xlu0 %v1769, 32
  %v1811 = vpop.permute.xlu0 %1810
  %1812 = vrot.lane.b32.xlu0 %v1770, 32
  %v1813 = vpop.permute.xlu0 %1812
  %1814 = vrot.lane.b32.xlu0 %v1771, 32
  %v1815 = vpop.permute.xlu0 %1814
  %v1820 = vld [vmem:[%s4] sm:$0xff]
  %v1821 = vld [vmem:[%s4 + $0x8] sm:$0xff]
  %v1822 = vld [vmem:[%s4 + $0x10] sm:$0xff]
  %v1823 = vld [vmem:[%s4 + $0x18] sm:$0xff]
  %v1824 = vld [vmem:[%s4 + $0x20] sm:$0xff]
  %v1825 = vld [vmem:[%s4 + $0x28] sm:$0xff]
  %v1826 = vld [vmem:[%s4 + $0x30] sm:$0xff]
  %v1827 = vld [vmem:[%s4 + $0x38] sm:$0xff]
  %1828 = vmatprep.subr.mxu0 0.0
  %1829 = vmatpush1.msra.mxu0 %v1626
  %1830 = vmatprep.subr.mxu0 0.0
  %1831 = vmatpush1.msra.mxu0 %v1627
  %1832 = vmatprep.subr.mxu0 0.0
  %1833 = vmatpush1.msra.mxu0 %v1628
  %1834 = vmatprep.subr.mxu0 0.0
  %1835 = vmatpush1.msra.mxu0 %v1629
  %1836 = vmatprep.subr.mxu0 0.0
  %1837 = vmatpush1.msra.mxu0 %v1777
  %1838 = vmatprep.subr.mxu0 0.0
  %1839 = vmatpush1.msra.mxu0 %v1779
  %1840 = vmatprep.subr.mxu0 0.0
  %1841 = vmatpush1.msra.mxu0 %v1781
  %1842 = vmatprep.subr.mxu0 0.0
  %1843 = vmatpush1.msra.mxu0 %v1783
  %1844 = vmatprep.subr.mxu0 0.0
  %1845 = vmatpush1.msra.mxu0 %v1793
  %1846 = vmatprep.subr.mxu0 0.0
  %1847 = vmatpush1.msra.mxu0 %v1795
  %1848 = vmatprep.subr.mxu0 0.0
  %1849 = vmatpush1.msra.mxu0 %v1797
  %1850 = vmatprep.subr.mxu0 0.0
  %1851 = vmatpush1.msra.mxu0 %v1799
  %1852 = vmatprep.subr.mxu0 0.0
  %1853 = vmatpush1.msra.mxu0 %v1809
  %1854 = vmatprep.subr.mxu0 0.0
  %1855 = vmatpush1.msra.mxu0 %v1811
  %1856 = vmatprep.subr.mxu0 0.0
  %1857 = vmatpush1.msra.mxu0 %v1813
  %1858 = vmatprep.subr.mxu0 0.0
  %1859 = vmatpush1.msra.mxu0 %v1815
  %1860 = vmatprep.subr.mxu0 0.0
  %1861 = vmatpush1.msra.mxu0 0.0
  %1862 = vmatprep.subr.mxu0 0.0
  %1863 = vmatpush1.msra.mxu0 0.0
  %1864 = vmatprep.subr.mxu0 0.0
  %1865 = vmatpush1.msra.mxu0 0.0
  %1866 = vmatprep.subr.mxu0 0.0
  %1867 = vmatpush1.msra.mxu0 0.0
  %1868 = vmatprep.subr.mxu0 0.0
  %1869 = vmatpush1.msra.mxu0 0.0
  %1870 = vmatprep.subr.mxu0 0.0
  %1871 = vmatpush1.msra.mxu0 0.0
  %1872 = vmatprep.subr.mxu0 0.0
  %1873 = vmatpush1.msra.mxu0 0.0
  %1874 = vmatprep.subr.mxu0 0.0
  %1875 = vmatpush1.msra.mxu0 0.0
  %1876 = vmatprep.subr.mxu0 0.0
  %1877 = vmatpush1.msra.mxu0 0.0
  %1878 = vmatprep.subr.mxu0 0.0
  %1879 = vmatpush1.msra.mxu0 0.0
  %1880 = vmatprep.subr.mxu0 0.0
  %1881 = vmatpush1.msra.mxu0 0.0
  %1882 = vmatprep.subr.mxu0 0.0
  %1883 = vmatpush1.msra.mxu0 0.0
  %1884 = vmatprep.subr.mxu0 0.0
  %1885 = vmatpush1.msra.mxu0 0.0
  %1886 = vmatprep.subr.mxu0 0.0
  %1887 = vmatpush1.msra.mxu0 0.0
  %1888 = vmatprep.subr.mxu0 0.0
  %1889 = vmatpush1.msra.mxu0 0.0
  %1890 = vmatprep.subr.mxu0 0.0
  %1891 = vmatpush1.msra.mxu0 0.0
  %1892 = vmatprep.mubr.f32.mxu0 0.0
  %1893 = vmatmul.mubr.f32.gmra.mrb[0].mxu0 %v1820
  %v1894 = vpop.f32.mrb[0].mxu0
  %v1895 = vadd.f32 0.0, %v1894
  %v1896 = vpop.f32.mrb[0].mxu0
  %1897 = vmatprep.mubr.f32.mxu0 0.0
  %1898 = vmatmul.mubr.f32.gmra.mrb[0].mxu0 %v1821
  %v1899 = vpop.f32.mrb[0].mxu0
  %v1900 = vadd.f32 0.0, %v1899
  %v1901 = vpop.f32.mrb[0].mxu0
  %1902 = vmatprep.mubr.f32.mxu0 0.0
  %1903 = vmatmul.mubr.f32.gmra.mrb[0].mxu0 %v1822
  %v1904 = vpop.f32.mrb[0].mxu0
  %v1905 = vadd.f32 0.0, %v1904
  %v1906 = vpop.f32.mrb[0].mxu0
  %1907 = vmatprep.mubr.f32.mxu0 0.0
  %1908 = vmatmul.mubr.f32.gmra.mrb[0].mxu0 %v1823
  %v1909 = vpop.f32.mrb[0].mxu0
  %v1910 = vadd.f32 0.0, %v1909
  %v1911 = vpop.f32.mrb[0].mxu0
  %1912 = vmatprep.mubr.f32.mxu0 0.0
  %1913 = vmatmul.mubr.f32.gmra.mrb[0].mxu0 %v1824
  %v1914 = vpop.f32.mrb[0].mxu0
  %v1915 = vadd.f32 0.0, %v1914
  %v1916 = vpop.f32.mrb[0].mxu0
  %1917 = vmatprep.mubr.f32.mxu0 0.0
  %1918 = vmatmul.mubr.f32.gmra.mrb[0].mxu0 %v1825
  %v1919 = vpop.f32.mrb[0].mxu0
  %v1920 = vadd.f32 0.0, %v1919
  %v1921 = vpop.f32.mrb[0].mxu0
  %1922 = vmatprep.mubr.f32.mxu0 0.0
  %1923 = vmatmul.mubr.f32.gmra.mrb[0].mxu0 %v1826
  %v1924 = vpop.f32.mrb[0].mxu0
  %v1925 = vadd.f32 0.0, %v1924
  %v1926 = vpop.f32.mrb[0].mxu0
  %1927 = vmatprep.mubr.f32.mxu0 0.0
  %1928 = vmatmul.mubr.f32.gmra.mrb[0].mxu0 %v1827
  %v1929 = vpop.f32.mrb[0].mxu0
  %v1930 = vadd.f32 0.0, %v1929
  %v1931 = vpop.f32.mrb[0].mxu0
  %1932 = vdwg.mxu0
  %1933 = vst.msk [vmem:[%s5] sm:$0xff] %vm135, %v1895
  %1934 = vst.msk [vmem:[%s5 + $0x8] sm:$0xff] %vm135, %v1900
  %1935 = vst.msk [vmem:[%s5 + $0x10] sm:$0xff] %vm135, %v1905
  %1936 = vst.msk [vmem:[%s5 + $0x18] sm:$0xff] %vm135, %v1910
  %1937 = vst.msk [vmem:[%s5 + $0x20] sm:$0xff] %vm135, %v1915
  %1938 = vst.msk [vmem:[%s5 + $0x28] sm:$0xff] %vm135, %v1920
  %1939 = vst.msk [vmem:[%s5 + $0x30] sm:$0xff] %vm135, %v1925
  %1940 = vst.msk [vmem:[%s5 + $0x38] sm:$0xff] %vm135, %v1930
  // Predicated region
  $region22: #{basic_stage_forward.1} parent=0 // pred_check
    _
  $region23: #{basic_stage_forward.1} parent=0 // pred_check_branch
    %1942 = sbr.rel (0) target = $region25
  $region24: #{basic_stage_forward.1} parent=0 // pred_region
    _
  $region25: #{basic_stage_forward.1} parent=0 // pred_fallthru
    _
  // Predicated region
  $region26: #{basic_stage_forward.1} parent=0 // pred_check
    _
  $region27: #{basic_stage_forward.1} parent=0 // pred_check_branch
    %1944 = sbr.rel (0) target = $region29
  $region28: #{basic_stage_forward.1} parent=0 // pred_region
    _
  $region29: #{basic_stage_forward.1} parent=0 // pred_fallthru
    _

</llo_original>
